<compile_context>
chip_gen: v7x
topology: tpu7x:2x2x1
jax: 0.10.0
libtpu: 0.0.40
codegen_flags: <defaults>
</compile_context>

<pallas_src>
import jax
import jax.numpy as jnp
from jax import lax
from jax.experimental import pallas as pl
from jax.experimental.pallas import tpu as pltpu


NODE_TYPES = ("news", "entities", "topic", "kg_entities")
TYPE_IDX = {t: i for i, t in enumerate(NODE_TYPES)}
NEWS_IDX = TYPE_IDX["news"]
NUM_TYPES = len(NODE_TYPES)

# Relations ordered so relations sharing a destination type are consecutive
# (required for the in-kernel accumulator over the relation grid axis).
RELATIONS = (
    ("news", "has", "entities"),
    ("entities", "similar", "entities"),
    ("entities", "in", "news"),
    ("topic", "in", "news"),
    ("kg_entities", "in", "news"),
    ("news", "on", "topic"),
    ("news", "has", "kg_entities"),
)
NUM_REL = len(RELATIONS)

LANE = 128
SUBLANE = 8
DST_TILE = 8          # dst rows per score slab (bounds the [td, ts, C] f32 live set)
MAX_NS_TILE = 256     # source-tile depth; 256 fills v6e/v7x MXU K (use 128 on v5e)


def _round_up(n, m):
    return ((n + m - 1) // m) * m


def _pad2(a, rows, cols):
    return jnp.pad(a, ((0, rows - a.shape[0]), (0, cols - a.shape[1])))


def relation_meta():
    """int32 scalar-prefetch arrays: src type, dst type, first/last-of-dst-group flags."""
    src_t = jnp.array([TYPE_IDX[s] for s, _, _ in RELATIONS], jnp.int32)
    dst_t = jnp.array([TYPE_IDX[d] for _, _, d in RELATIONS], jnp.int32)
    dst_list = [TYPE_IDX[d] for _, _, d in RELATIONS]
    first = [1 if i == 0 or dst_list[i] != dst_list[i - 1] else 0 for i in range(NUM_REL)]
    last = [1 if i == NUM_REL - 1 or dst_list[i] != dst_list[i + 1] else 0
            for i in range(NUM_REL)]
    return src_t, dst_t, jnp.array(first, jnp.int32), jnp.array(last, jnp.int32)


# -------------------------- attention helper (per dst-row tile) --------------------------

def _attend(hr_d, adj_d, hl_f, hl_b, att3, ns_tile):
    """Masked GATv2 attention for one dst-row tile.

    Returns (unnormalized weighted sum of hl [td, C] f32, softmax denominators [td, 1]).
    """
    td, c = hr_d.shape
    n_src = hl_f.shape[0]
    n_tiles = n_src // ns_tile

    def score(hr_blk, hl_blk, adj_blk):
        mask = adj_blk > 0.5
        s = hr_blk[:, None, :] + hl_blk[None, :, :]          # [td, ts, C] f32
        s = jnp.where(s > 0, s, 0.2 * s)                     # LeakyReLU(0.2)
        # TODO(synk): MXU-ize this C-reduction (reshape + dot against att^T) once the
        # [td*ts,1] -> [td,ts] relayout is validated on all targets.
        e = jnp.sum(s * att3, axis=-1)                       # [td, ts]
        return jnp.where(mask, e, -1e30), mask

    if n_tiles == 1:
        e, mask = score(hr_d, hl_f, adj_d)
        m = jnp.max(e, axis=-1, keepdims=True)
        p = jnp.where(mask, jnp.exp(e - m), 0.0)
        lsum = jnp.sum(p, axis=-1, keepdims=True)
        acc = jnp.dot(p.astype(jnp.bfloat16), hl_b, preferred_element_type=jnp.float32)
        return acc, lsum

    # Online (flash-style) masked softmax over source tiles: only a [td, ns_tile, C]
    # slab is live at a time; lax.fori_loop keeps live ranges bounded.
    def body(t, carry):
        m, lsum, acc = carry
        lo = t * ns_tile
        hl_t = lax.dynamic_slice_in_dim(hl_f, lo, ns_tile, axis=0)
        hlb_t = lax.dynamic_slice_in_dim(hl_b, lo, ns_tile, axis=0)
        adj_t = lax.dynamic_slice_in_dim(adj_d, lo, ns_tile, axis=1)
        e, mask = score(hr_d, hl_t, adj_t)
        m_new = jnp.maximum(m, jnp.max(e, axis=-1, keepdims=True))
        scale = jnp.exp(m - m_new)
        p = jnp.where(mask, jnp.exp(e - m_new), 0.0)
        lsum = scale * lsum + jnp.sum(p, axis=-1, keepdims=True)
        acc = scale * acc + jnp.dot(p.astype(jnp.bfloat16), hlb_t,
                                    preferred_element_type=jnp.float32)
        return m_new, lsum, acc

    m0 = jnp.full((td, 1), -1e30, jnp.float32)
    l0 = jnp.zeros((td, 1), jnp.float32)
    a0 = jnp.zeros((td, c), jnp.float32)
    _, lsum, acc = lax.fori_loop(0, n_tiles, body, (m0, l0, a0))
    return acc, lsum


# ---------------------------------- fused kernel ----------------------------------

def _make_fused_kernel(n_pad, c_pad, num_layers, ns_tile, dst_tile):
    """One grid step = (layer, relation): GATv2 + HeteroConv sum; ReLU / final Linear
    epilogues are phase-gated with pl.when."""

    def kernel(src_t_ref, dst_t_ref, first_ref, last_ref,        # SMEM scalar prefetch
               x0_ref, wl_ref, wr_ref, att_ref, bias_ref, adj_ref,
               lin_w_ref, lin_b_ref,                              # inputs
               logits_ref,                                        # output
               x_buf, acc_buf):                                   # VMEM scratch
        l = pl.program_id(0)
        r = pl.program_id(1)

        st = src_t_ref[r]
        dt = dst_t_ref[r]
        is_first = first_ref[r] == 1
        is_last = last_ref[r] == 1

        read_base = (l % 2) * NUM_TYPES          # ping-pong activation slots
        write_base = ((l + 1) % 2) * NUM_TYPES

        # Stage the HBM features into the layer-0 read slot once (first grid step).
        @pl.when(jnp.logical_and(l == 0, r == 0))
        def _():
            for t in range(NUM_TYPES):
                x_buf[t] = x0_ref[t]

        x_src = x_buf[read_base + st]            # [N, C] bf16 (previous layer's output)
        x_dst = x_buf[read_base + dt]

        # GATv2 projections on the MXU (bf16 in, f32 accumulate).
        hl = jnp.dot(x_src, wl_ref[0, 0], preferred_element_type=jnp.float32)   # src
        hr = jnp.dot(x_dst, wr_ref[0, 0], preferred_element_type=jnp.float32)   # dst
        hl_b = hl.astype(jnp.bfloat16)           # hoisted: cast once, slice per tile
        att3 = att_ref[0, 0][None, :, :]         # hoisted broadcast operand [1,1,C] f32
        adjf = adj_ref[0]                        # [N, N] f32  (adj[dst, src] == 1 => edge)
        bias = bias_ref[0, 0]                    # [1, C] f32

        # Masked softmax attention, tiled over destination rows to bound vreg pressure.
        rows = []
        for d0 in range(0, n_pad, dst_tile):
            acc, lsum = _attend(hr[d0:d0 + dst_tile],
                                adjf[d0:d0 + dst_tile, :],
                                hl, hl_b, att3, ns_tile)
            inv = pl.reciprocal(jnp.maximum(lsum, 1e-30), approx=True)     # EUP slot
            rows.append(acc * inv + bias)        # edge-less dst rows -> bias
        y = rows[0] if len(rows) == 1 else jnp.concatenate(rows, axis=0)   # [N, C] f32

        # HeteroConv aggr='sum' across relations sharing this destination type.
        @pl.when(is_first)
        def _():
            acc_buf[...] = y

        @pl.when(jnp.logical_not(is_first))
        def _():
            acc_buf[...] = acc_buf[...] + y

        # Last relation of the dst group: ReLU and publish into the next layer's slot.
        @pl.when(is_last)
        def _():
            x_buf[write_base + dt] = jnp.maximum(acc_buf[...], 0.0).astype(jnp.bfloat16)

        # Final layer + 'news' destination: fuse the output Linear here.
        @pl.when(jnp.logical_and(
            is_last, jnp.logical_and(l == num_layers - 1, dt == NEWS_IDX)))
        def _():
            h = jnp.maximum(acc_buf[...], 0.0).astype(jnp.bfloat16)
            logits_ref[...] = (jnp.dot(h, lin_w_ref[...],
                                       preferred_element_type=jnp.float32)
                               + lin_b_ref[...])

    return kernel


def kg_hetero_gnn_forward(params, x_all, adj_all, meta):
    """Whole network in one pallas_call.  Returns padded logits [n_pad, c_out_pad]."""
    src_t, dst_t, first, last = meta
    n_types, n_pad, c_pad = x_all.shape
    assert n_types == NUM_TYPES
    num_layers = params["wl"].shape[0]
    c_out_pad = params["lin_w"].shape[-1]

    ns_tile = n_pad if n_pad <= MAX_NS_TILE else MAX_NS_TILE
    assert n_pad % ns_tile == 0
    dst_tile = min(n_pad, DST_TILE)
    assert n_pad % dst_tile == 0

    kernel = _make_fused_kernel(n_pad, c_pad, num_layers, ns_tile, dst_tile)

    def _lr(l, r, st, dt, fi, la):
        return (l, r, 0, 0)

    def _rel(l, r, st, dt, fi, la):
        return (r, 0, 0)

    def _one3(l, r, st, dt, fi, la):
        return (0, 0, 0)

    def _one2(l, r, st, dt, fi, la):
        return (0, 0)

    grid_spec = pltpu.PrefetchScalarGridSpec(
        num_scalar_prefetch=4,
        grid=(num_layers, NUM_REL),                              # relations innermost
        in_specs=[
            pl.BlockSpec((n_types, n_pad, c_pad), _one3),        # x0 (bf16, VMEM-resident)
            pl.BlockSpec((1, 1, c_pad, c_pad), _lr),             # Wl  (bf16)
            pl.BlockSpec((1, 1, c_pad, c_pad), _lr),             # Wr  (bf16)
            pl.BlockSpec((1, 1, 1, c_pad), _lr),                 # att (f32)
            pl.BlockSpec((1, 1, 1, c_pad), _lr),                 # bias(f32)
            pl.BlockSpec((1, n_pad, n_pad), _rel),               # adjacency mask (f32)
            pl.BlockSpec((c_pad, c_out_pad), _one2),             # final Linear W (bf16)
            pl.BlockSpec((1, c_out_pad), _one2),                 # final Linear b (f32)
        ],
        out_specs=pl.BlockSpec((n_pad, c_out_pad), _one2),       # logits (lane-dense)
        scratch_shapes=[
            pltpu.VMEM((2 * n_types, n_pad, c_pad), jnp.bfloat16),  # ping-pong activations
            pltpu.VMEM((n_pad, c_pad), jnp.float32),                # dst-type accumulator
        ],
    )

    return pl.pallas_call(
        kernel,
        out_shape=jax.ShapeDtypeStruct((n_pad, c_out_pad), jnp.float32),
        grid_spec=grid_spec,
        compiler_params=pltpu.CompilerParams(
            # Both grid axes carry VMEM scratch state across steps -> 'arbitrary'.
            # TODO(synk): add a leading 'parallel' dst-tile axis for v7x's 2nd TensorCore.
            dimension_semantics=("arbitrary", "arbitrary"),
            vmem_limit_bytes=32 * 1024 * 1024,
        ),
    )(src_t, dst_t, first, last,
      x_all, params["wl"], params["wr"], params["att"], params["bias"],
      adj_all, params["lin_w"], params["lin_b"])


# ------------------------------- params -------------------------------

def init_params(key, in_dims, hidden_channels, out_channels, num_layers):
    """Synthetic parameters matching the PyTorch module's shapes, stacked over
    (layer, relation) and zero-padded to one common lane-padded feature dim."""
    c_pad = _round_up(max(max(in_dims.values()), hidden_channels), LANE)
    hc = hidden_channels
    dims = dict(in_dims)
    wl_L, wr_L, att_L, b_L = [], [], [], []
    for i in range(num_layers):
        wl_R, wr_R, att_R, b_R = [], [], [], []
        for src, _, dst in RELATIONS:
            key, k1, k2, k3 = jax.random.split(key, 4)
            fs, fd = dims[src], dims[dst]
            wl = jax.random.normal(k1, (fs, hc), jnp.float32) / jnp.sqrt(jnp.float32(fs))
            wr = jax.random.normal(k2, (fd, hc), jnp.float32) / jnp.sqrt(jnp.float32(fd))
            att = jax.random.normal(k3, (1, hc), jnp.float32) / jnp.sqrt(jnp.float32(hc))
            wl_R.append(_pad2(wl, c_pad, c_pad))
            wr_R.append(_pad2(wr, c_pad, c_pad))
            att_R.append(_pad2(att, 1, c_pad))
            b_R.append(jnp.zeros((1, c_pad), jnp.float32))
        wl_L.append(jnp.stack(wl_R))
        wr_L.append(jnp.stack(wr_R))
        att_L.append(jnp.stack(att_R))
        b_L.append(jnp.stack(b_R))
        dims = {k: hc for k in dims}                 # lazy (-1) in_channels -> hidden
        if i != num_layers - 1:
            hc = hc // 2                             # hidden_channels /= 2
    key, k1 = jax.random.split(key)
    c_out_pad = _round_up(out_channels, LANE)
    lin_w = jax.random.normal(k1, (hc, out_channels), jnp.float32) / jnp.sqrt(jnp.float32(hc))
    return {
        "wl": jnp.stack(wl_L).astype(jnp.bfloat16),           # [L, R, C, C]
        "wr": jnp.stack(wr_L).astype(jnp.bfloat16),           # [L, R, C, C]
        "att": jnp.stack(att_L),                              # [L, R, 1, C] f32
        "bias": jnp.stack(b_L),                               # [L, R, 1, C] f32
        "lin_w": _pad2(lin_w, c_pad, c_out_pad).astype(jnp.bfloat16),
        "lin_b": jnp.zeros((1, c_out_pad), jnp.float32),
    }


# -------------------------------- driver --------------------------------

if __name__ == "__main__":
    root = jax.random.PRNGKey(0)
    data_key, param_key = jax.random.split(root)

    num_nodes = {"news": 8, "entities": 16, "topic": 4, "kg_entities": 8}
    feat_dim = 32
    hidden_channels, out_channels, num_layers = 32, 4, 2

    n_pad = _round_up(max(max(num_nodes.values()), SUBLANE), SUBLANE)
    c_pad = _round_up(max(feat_dim, hidden_channels), LANE)

    # Node features stacked [num_types, n_pad, c_pad], stored bf16 (halves DMA bytes).
    x_list = []
    for ntype in NODE_TYPES:
        data_key, sub = jax.random.split(data_key)
        x = jax.random.normal(sub, (num_nodes[ntype], feat_dim), jnp.float32)
        x_list.append(jnp.pad(x, ((0, n_pad - x.shape[0]), (0, c_pad - feat_dim))))
    x_all = jnp.stack(x_list).astype(jnp.bfloat16)

    # Dense per-relation adjacency masks adj[dst, src] (1.0 = edge), padded & stacked.
    # TODO(synk): int8 / bit-packed adjacency (or gathered neighbor lists) at real sizes.
    adj_list = []
    for src, _, dst in RELATIONS:
        data_key, sub = jax.random.split(data_key)
        adj = (jax.random.uniform(sub, (num_nodes[dst], num_nodes[src])) < 0.3
               ).astype(jnp.float32)
        if src == dst:  # homogeneous relation: add self loops (GATv2 default)
            adj = jnp.maximum(adj, jnp.eye(num_nodes[src], dtype=jnp.float32))
        adj_list.append(jnp.pad(adj, ((0, n_pad - adj.shape[0]),
                                      (0, n_pad - adj.shape[1]))))
    adj_all = jnp.stack(adj_list)

    in_dims = {k: feat_dim for k in num_nodes}
    params = init_params(param_key, in_dims, hidden_channels, out_channels, num_layers)
    meta = relation_meta()

    fwd = jax.jit(kg_hetero_gnn_forward)
    logits_padded = jax.block_until_ready(fwd(params, x_all, adj_all, meta))
    out = logits_padded[:num_nodes["news"], :out_channels]

    assert out.shape == (num_nodes["news"], out_channels)
    assert bool(jnp.all(jnp.isfinite(out)))
    print("KERNEL_OK")
</pallas_src>

<mosaic_0001>
module attributes {stable_mosaic.version = 11 : i64} {
  func.func @kernel(%arg0: i32, %arg1: i32, %arg2: memref<7xi32, #tpu.memory_space<smem>>, %arg3: memref<7xi32, #tpu.memory_space<smem>>, %arg4: memref<7xi32, #tpu.memory_space<smem>>, %arg5: memref<7xi32, #tpu.memory_space<smem>>, %arg6: memref<4x16x128xbf16, #tpu.memory_space<vmem>>, %arg7: memref<1x1x128x128xbf16, #tpu.memory_space<vmem>>, %arg8: memref<1x1x128x128xbf16, #tpu.memory_space<vmem>>, %arg9: memref<1x1x1x128xf32, #tpu.memory_space<vmem>>, %arg10: memref<1x1x1x128xf32, #tpu.memory_space<vmem>>, %arg11: memref<1x16x16xf32, #tpu.memory_space<vmem>>, %arg12: memref<128x128xbf16, #tpu.memory_space<vmem>>, %arg13: memref<1x128xf32, #tpu.memory_space<vmem>>, %arg14: memref<16x128xf32, #tpu.memory_space<vmem>>, %arg15: memref<8x16x128xbf16, #tpu.memory_space<vmem>>, %arg16: memref<16x128xf32, #tpu.memory_space<vmem>>) attributes {dimension_semantics = [#tpu.dimension_semantics<arbitrary>, #tpu.dimension_semantics<arbitrary>], iteration_bounds = array<i64: 2, 7>, scalar_prefetch = 4 : i64, scratch_operands = 2 : i64, tpu.core_type = #tpu.core_type<tc>, window_params = [{pipeline_mode = #tpu.pipeline_mode<synchronous>, transform_indices = @transform_0, window_bounds = array<i64: 4, 16, 128>}, {transform_indices = @transform_1, window_bounds = array<i64: 1, 1, 128, 128>}, {transform_indices = @transform_2, window_bounds = array<i64: 1, 1, 128, 128>}, {transform_indices = @transform_3, window_bounds = array<i64: 1, 1, 1, 128>}, {transform_indices = @transform_4, window_bounds = array<i64: 1, 1, 1, 128>}, {transform_indices = @transform_5, window_bounds = array<i64: 1, 16, 16>}, {pipeline_mode = #tpu.pipeline_mode<synchronous>, transform_indices = @transform_6, window_bounds = array<i64: 128, 128>}, {pipeline_mode = #tpu.pipeline_mode<synchronous>, transform_indices = @transform_7, window_bounds = array<i64: 1, 128>}, {pipeline_mode = #tpu.pipeline_mode<synchronous>, transform_indices = @transform_8, window_bounds = array<i64: 16, 128>}]} {
    %0 = arith.index_cast %arg1 : i32 to index
    %1 = memref.load %arg2[%0] : memref<7xi32, #tpu.memory_space<smem>>
    %2 = arith.index_cast %arg1 : i32 to index
    %3 = memref.load %arg3[%2] : memref<7xi32, #tpu.memory_space<smem>>
    %4 = arith.index_cast %arg1 : i32 to index
    %5 = memref.load %arg4[%4] : memref<7xi32, #tpu.memory_space<smem>>
    %c1_i32 = arith.constant 1 : i32
    %6 = arith.cmpi eq, %5, %c1_i32 : i32
    %7 = arith.index_cast %arg1 : i32 to index
    %8 = memref.load %arg5[%7] : memref<7xi32, #tpu.memory_space<smem>>
    %c1_i32_0 = arith.constant 1 : i32
    %9 = arith.cmpi eq, %8, %c1_i32_0 : i32
    %c2_i32 = arith.constant 2 : i32
    %c0_i32 = arith.constant 0 : i32
    %10 = arith.cmpi eq, %c2_i32, %c0_i32 : i32
    %c1_i32_1 = arith.constant 1 : i32
    %11 = arith.select %10, %c1_i32_1, %c2_i32 : i32
    %12 = arith.remsi %arg0, %11 : i32
    %c0_i32_2 = arith.constant 0 : i32
    %13 = arith.cmpi ne, %12, %c0_i32_2 : i32
    %c0_i32_3 = arith.constant 0 : i32
    %14 = arith.cmpi slt, %12, %c0_i32_3 : i32
    %c0_i32_4 = arith.constant 0 : i32
    %15 = arith.cmpi slt, %11, %c0_i32_4 : i32
    %16 = arith.xori %14, %15 : i1
    %17 = arith.andi %16, %13 : i1
    %18 = arith.addi %12, %11 : i32
    %19 = arith.select %17, %18, %12 : i32
    %c4_i32 = arith.constant 4 : i32
    %20 = arith.muli %19, %c4_i32 : i32
    %c1_i32_5 = arith.constant 1 : i32
    %21 = arith.addi %arg0, %c1_i32_5 : i32
    %c2_i32_6 = arith.constant 2 : i32
    %c0_i32_7 = arith.constant 0 : i32
    %22 = arith.cmpi eq, %c2_i32_6, %c0_i32_7 : i32
    %c1_i32_8 = arith.constant 1 : i32
    %23 = arith.select %22, %c1_i32_8, %c2_i32_6 : i32
    %24 = arith.remsi %21, %23 : i32
    %c0_i32_9 = arith.constant 0 : i32
    %25 = arith.cmpi ne, %24, %c0_i32_9 : i32
    %c0_i32_10 = arith.constant 0 : i32
    %26 = arith.cmpi slt, %24, %c0_i32_10 : i32
    %c0_i32_11 = arith.constant 0 : i32
    %27 = arith.cmpi slt, %23, %c0_i32_11 : i32
    %28 = arith.xori %26, %27 : i1
    %29 = arith.andi %28, %25 : i1
    %30 = arith.addi %24, %23 : i32
    %31 = arith.select %29, %30, %24 : i32
    %c4_i32_12 = arith.constant 4 : i32
    %32 = arith.muli %31, %c4_i32_12 : i32
    %c0_i32_13 = arith.constant 0 : i32
    %33 = arith.cmpi eq, %arg0, %c0_i32_13 : i32
    %c0_i32_14 = arith.constant 0 : i32
    %34 = arith.cmpi eq, %arg1, %c0_i32_14 : i32
    %35 = arith.andi %33, %34 : i1
    %36 = arith.extui %35 : i1 to i32
    %c0_i32_15 = arith.constant 0 : i32
    %37 = arith.cmpi ne, %36, %c0_i32_15 : i32
    scf.if %37 {
      %c0_65 = arith.constant 0 : index
      %c0_66 = arith.constant 0 : index
      %c0_67 = arith.constant 0 : index
      %148 = vector.load %arg6[%c0_65, %c0_66, %c0_67] : memref<4x16x128xbf16, #tpu.memory_space<vmem>>, vector<1x16x128xbf16>
      %149 = vector.shape_cast %148 : vector<1x16x128xbf16> to vector<16x128xbf16>
      %c0_68 = arith.constant 0 : index
      %c0_69 = arith.constant 0 : index
      %c0_70 = arith.constant 0 : index
      %150 = vector.load %arg15[%c0_68, %c0_69, %c0_70] : memref<8x16x128xbf16, #tpu.memory_space<vmem>>, vector<1x16x128xbf16>
      %151 = vector.shape_cast %150 : vector<1x16x128xbf16> to vector<16x128xbf16>
      %152 = vector.shape_cast %149 : vector<16x128xbf16> to vector<1x16x128xbf16>
      tpu.vector_store %arg15[%c0_68, %c0_69, %c0_70], %152 {strides = array<i32>} : memref<8x16x128xbf16, #tpu.memory_space<vmem>>, vector<1x16x128xbf16>,
      %c1 = arith.constant 1 : index
      %c0_71 = arith.constant 0 : index
      %c0_72 = arith.constant 0 : index
      %153 = vector.load %arg6[%c1, %c0_71, %c0_72] : memref<4x16x128xbf16, #tpu.memory_space<vmem>>, vector<1x16x128xbf16>
      %154 = vector.shape_cast %153 : vector<1x16x128xbf16> to vector<16x128xbf16>
      %c1_73 = arith.constant 1 : index
      %c0_74 = arith.constant 0 : index
      %c0_75 = arith.constant 0 : index
      %155 = vector.load %arg15[%c1_73, %c0_74, %c0_75] : memref<8x16x128xbf16, #tpu.memory_space<vmem>>, vector<1x16x128xbf16>
      %156 = vector.shape_cast %155 : vector<1x16x128xbf16> to vector<16x128xbf16>
      %157 = vector.shape_cast %154 : vector<16x128xbf16> to vector<1x16x128xbf16>
      tpu.vector_store %arg15[%c1_73, %c0_74, %c0_75], %157 {strides = array<i32>} : memref<8x16x128xbf16, #tpu.memory_space<vmem>>, vector<1x16x128xbf16>,
      %c2 = arith.constant 2 : index
      %c0_76 = arith.constant 0 : index
      %c0_77 = arith.constant 0 : index
      %158 = vector.load %arg6[%c2, %c0_76, %c0_77] : memref<4x16x128xbf16, #tpu.memory_space<vmem>>, vector<1x16x128xbf16>
      %159 = vector.shape_cast %158 : vector<1x16x128xbf16> to vector<16x128xbf16>
      %c2_78 = arith.constant 2 : index
      %c0_79 = arith.constant 0 : index
      %c0_80 = arith.constant 0 : index
      %160 = vector.load %arg15[%c2_78, %c0_79, %c0_80] : memref<8x16x128xbf16, #tpu.memory_space<vmem>>, vector<1x16x128xbf16>
      %161 = vector.shape_cast %160 : vector<1x16x128xbf16> to vector<16x128xbf16>
      %162 = vector.shape_cast %159 : vector<16x128xbf16> to vector<1x16x128xbf16>
      tpu.vector_store %arg15[%c2_78, %c0_79, %c0_80], %162 {strides = array<i32>} : memref<8x16x128xbf16, #tpu.memory_space<vmem>>, vector<1x16x128xbf16>,
      %c3 = arith.constant 3 : index
      %c0_81 = arith.constant 0 : index
      %c0_82 = arith.constant 0 : index
      %163 = vector.load %arg6[%c3, %c0_81, %c0_82] : memref<4x16x128xbf16, #tpu.memory_space<vmem>>, vector<1x16x128xbf16>
      %164 = vector.shape_cast %163 : vector<1x16x128xbf16> to vector<16x128xbf16>
      %c3_83 = arith.constant 3 : index
      %c0_84 = arith.constant 0 : index
      %c0_85 = arith.constant 0 : index
      %165 = vector.load %arg15[%c3_83, %c0_84, %c0_85] : memref<8x16x128xbf16, #tpu.memory_space<vmem>>, vector<1x16x128xbf16>
      %166 = vector.shape_cast %165 : vector<1x16x128xbf16> to vector<16x128xbf16>
      %167 = vector.shape_cast %164 : vector<16x128xbf16> to vector<1x16x128xbf16>
      tpu.vector_store %arg15[%c3_83, %c0_84, %c0_85], %167 {strides = array<i32>} : memref<8x16x128xbf16, #tpu.memory_space<vmem>>, vector<1x16x128xbf16>,
    } else {
    }
    %38 = arith.addi %20, %1 : i32
    %39 = arith.index_cast %38 : i32 to index
    %c0 = arith.constant 0 : index
    %c0_16 = arith.constant 0 : index
    %40 = vector.load %arg15[%39, %c0, %c0_16] : memref<8x16x128xbf16, #tpu.memory_space<vmem>>, vector<1x16x128xbf16>
    %41 = vector.shape_cast %40 : vector<1x16x128xbf16> to vector<16x128xbf16>
    %42 = arith.addi %20, %3 : i32
    %43 = arith.index_cast %42 : i32 to index
    %c0_17 = arith.constant 0 : index
    %c0_18 = arith.constant 0 : index
    %44 = vector.load %arg15[%43, %c0_17, %c0_18] : memref<8x16x128xbf16, #tpu.memory_space<vmem>>, vector<1x16x128xbf16>
    %45 = vector.shape_cast %44 : vector<1x16x128xbf16> to vector<16x128xbf16>
    %c0_19 = arith.constant 0 : index
    %c0_20 = arith.constant 0 : index
    %c0_21 = arith.constant 0 : index
    %c0_22 = arith.constant 0 : index
    %46 = vector.load %arg7[%c0_19, %c0_20, %c0_21, %c0_22] : memref<1x1x128x128xbf16, #tpu.memory_space<vmem>>, vector<1x1x128x128xbf16>
    %47 = vector.shape_cast %46 : vector<1x1x128x128xbf16> to vector<128x128xbf16>
    %cst = arith.constant dense<0.000000e+00> : vector<16x128xf32>
    %48 = tpu.matmul %41, %47, %cst {dimension_numbers = #tpu.dot_dimension_numbers<[1], [0], [0], [1], [0, 0, 1, 1], [], []>} : vector<16x128xbf16>, vector<128x128xbf16>, vector<16x128xf32> -> vector<16x128xf32>
    %c0_23 = arith.constant 0 : index
    %c0_24 = arith.constant 0 : index
    %c0_25 = arith.constant 0 : index
    %c0_26 = arith.constant 0 : index
    %49 = vector.load %arg8[%c0_23, %c0_24, %c0_25, %c0_26] : memref<1x1x128x128xbf16, #tpu.memory_space<vmem>>, vector<1x1x128x128xbf16>
    %50 = vector.shape_cast %49 : vector<1x1x128x128xbf16> to vector<128x128xbf16>
    %cst_27 = arith.constant dense<0.000000e+00> : vector<16x128xf32>
    %51 = tpu.matmul %45, %50, %cst_27 {dimension_numbers = #tpu.dot_dimension_numbers<[1], [0], [0], [1], [0, 0, 1, 1], [], []>} : vector<16x128xbf16>, vector<128x128xbf16>, vector<16x128xf32> -> vector<16x128xf32>
    %52 = arith.truncf %48 : vector<16x128xf32> to vector<16x128xbf16>
    %c0_28 = arith.constant 0 : index
    %c0_29 = arith.constant 0 : index
    %c0_30 = arith.constant 0 : index
    %c0_31 = arith.constant 0 : index
    %53 = vector.load %arg9[%c0_28, %c0_29, %c0_30, %c0_31] : memref<1x1x1x128xf32, #tpu.memory_space<vmem>>, vector<1x1x1x128xf32>
    %54 = vector.shape_cast %53 : vector<1x1x1x128xf32> to vector<1x128xf32>
    %55 = vector.shape_cast %54 : vector<1x128xf32> to vector<1x1x128xf32>
    %c0_32 = arith.constant 0 : index
    %c0_33 = arith.constant 0 : index
    %c0_34 = arith.constant 0 : index
    %56 = vector.load %arg11[%c0_32, %c0_33, %c0_34] : memref<1x16x16xf32, #tpu.memory_space<vmem>>, vector<1x16x16xf32>
    %57 = vector.shape_cast %56 : vector<1x16x16xf32> to vector<16x16xf32>
    %c0_35 = arith.constant 0 : index
    %c0_36 = arith.constant 0 : index
    %c0_37 = arith.constant 0 : index
    %c0_38 = arith.constant 0 : index
    %58 = vector.load %arg10[%c0_35, %c0_36, %c0_37, %c0_38] : memref<1x1x1x128xf32, #tpu.memory_space<vmem>>, vector<1x1x1x128xf32>
    %59 = vector.shape_cast %58 : vector<1x1x1x128xf32> to vector<1x128xf32>
    %60 = vector.extract_strided_slice %51 {offsets = [0, 0], sizes = [8, 128], strides = [1, 1]} : vector<16x128xf32> to vector<8x128xf32>
    %61 = vector.extract_strided_slice %57 {offsets = [0, 0], sizes = [8, 16], strides = [1, 1]} : vector<16x16xf32> to vector<8x16xf32>
    %cst_39 = arith.constant 5.000000e-01 : f32
    %62 = vector.broadcast %cst_39 : f32 to vector<8x16xf32>
    %63 = arith.cmpf ogt, %61, %62 : vector<8x16xf32>
    %64 = vector.shape_cast %60 : vector<8x128xf32> to vector<8x1x128xf32>
    %65 = vector.shape_cast %48 : vector<16x128xf32> to vector<1x16x128xf32>
    %66 = vector.broadcast %64 : vector<8x1x128xf32> to vector<8x16x128xf32>
    %67 = vector.broadcast %65 : vector<1x16x128xf32> to vector<8x16x128xf32>
    %68 = arith.addf %66, %67 : vector<8x16x128xf32>
    %cst_40 = arith.constant 0.000000e+00 : f32
    %69 = vector.broadcast %cst_40 : f32 to vector<8x16x128xf32>
    %70 = arith.cmpf ogt, %68, %69 : vector<8x16x128xf32>
    %cst_41 = arith.constant 2.000000e-01 : f32
    %71 = vector.broadcast %cst_41 : f32 to vector<8x16x128xf32>
    %72 = arith.mulf %71, %68 : vector<8x16x128xf32>
    %73 = arith.select %70, %68, %72 : vector<8x16x128xi1>, vector<8x16x128xf32>
    %74 = vector.broadcast %55 : vector<1x1x128xf32> to vector<8x16x128xf32>
    %75 = arith.mulf %73, %74 : vector<8x16x128xf32>
    %cst_42 = arith.constant dense<0.000000e+00> : vector<8x16xf32>
    %76 = vector.multi_reduction <add>, %75, %cst_42 [2] : vector<8x16x128xf32> to vector<8x16xf32>
    %cst_43 = arith.constant -1.000000e+30 : f32
    %77 = vector.broadcast %cst_43 : f32 to vector<8x16xf32>
    %78 = arith.select %63, %76, %77 : vector<8x16xi1>, vector<8x16xf32>
    %cst_44 = arith.constant dense<0xFF800000> : vector<8xf32>
    %79 = vector.multi_reduction <maximumf>, %78, %cst_44 [1] : vector<8x16xf32> to vector<8xf32>
    %80 = vector.shape_cast %79 : vector<8xf32> to vector<8x1xf32>
    %81 = vector.broadcast %80 : vector<8x1xf32> to vector<8x16xf32>
    %82 = arith.subf %78, %81 : vector<8x16xf32>
    %83 = math.exp %82 : vector<8x16xf32>
    %cst_45 = arith.constant 0.000000e+00 : f32
    %84 = vector.broadcast %cst_45 : f32 to vector<8x16xf32>
    %85 = arith.select %63, %83, %84 : vector<8x16xi1>, vector<8x16xf32>
    %cst_46 = arith.constant dense<0.000000e+00> : vector<8xf32>
    %86 = vector.multi_reduction <add>, %85, %cst_46 [1] : vector<8x16xf32> to vector<8xf32>
    %87 = vector.shape_cast %86 : vector<8xf32> to vector<8x1xf32>
    %88 = arith.truncf %85 : vector<8x16xf32> to vector<8x16xbf16>
    %cst_47 = arith.constant dense<0.000000e+00> : vector<8x128xf32>
    %89 = tpu.matmul %88, %52, %cst_47 {dimension_numbers = #tpu.dot_dimension_numbers<[1], [0], [0], [1], [0, 0, 1, 1], [], []>} : vector<8x16xbf16>, vector<16x128xbf16>, vector<8x128xf32> -> vector<8x128xf32>
    %cst_48 = arith.constant 1.000000e-30 : f32
    %90 = vector.broadcast %cst_48 : f32 to vector<8x1xf32>
    %91 = arith.maximumf %87, %90 : vector<8x1xf32>
    %92 = tpu.reciprocal %91 {approx = true} : vector<8x1xf32> -> vector<8x1xf32>
    %93 = vector.broadcast %92 : vector<8x1xf32> to vector<8x128xf32>
    %94 = arith.mulf %89, %93 : vector<8x128xf32>
    %95 = vector.broadcast %59 : vector<1x128xf32> to vector<8x128xf32>
    %96 = arith.addf %94, %95 : vector<8x128xf32>
    %97 = vector.extract_strided_slice %51 {offsets = [8, 0], sizes = [8, 128], strides = [1, 1]} : vector<16x128xf32> to vector<8x128xf32>
    %98 = vector.extract_strided_slice %57 {offsets = [8, 0], sizes = [8, 16], strides = [1, 1]} : vector<16x16xf32> to vector<8x16xf32>
    %cst_49 = arith.constant 5.000000e-01 : f32
    %99 = vector.broadcast %cst_49 : f32 to vector<8x16xf32>
    %100 = arith.cmpf ogt, %98, %99 : vector<8x16xf32>
    %101 = vector.shape_cast %97 : vector<8x128xf32> to vector<8x1x128xf32>
    %102 = vector.shape_cast %48 : vector<16x128xf32> to vector<1x16x128xf32>
    %103 = vector.broadcast %101 : vector<8x1x128xf32> to vector<8x16x128xf32>
    %104 = vector.broadcast %102 : vector<1x16x128xf32> to vector<8x16x128xf32>
    %105 = arith.addf %103, %104 : vector<8x16x128xf32>
    %cst_50 = arith.constant 0.000000e+00 : f32
    %106 = vector.broadcast %cst_50 : f32 to vector<8x16x128xf32>
    %107 = arith.cmpf ogt, %105, %106 : vector<8x16x128xf32>
    %cst_51 = arith.constant 2.000000e-01 : f32
    %108 = vector.broadcast %cst_51 : f32 to vector<8x16x128xf32>
    %109 = arith.mulf %108, %105 : vector<8x16x128xf32>
    %110 = arith.select %107, %105, %109 : vector<8x16x128xi1>, vector<8x16x128xf32>
    %111 = vector.broadcast %55 : vector<1x1x128xf32> to vector<8x16x128xf32>
    %112 = arith.mulf %110, %111 : vector<8x16x128xf32>
    %cst_52 = arith.constant dense<0.000000e+00> : vector<8x16xf32>
    %113 = vector.multi_reduction <add>, %112, %cst_52 [2] : vector<8x16x128xf32> to vector<8x16xf32>
    %cst_53 = arith.constant -1.000000e+30 : f32
    %114 = vector.broadcast %cst_53 : f32 to vector<8x16xf32>
    %115 = arith.select %100, %113, %114 : vector<8x16xi1>, vector<8x16xf32>
    %cst_54 = arith.constant dense<0xFF800000> : vector<8xf32>
    %116 = vector.multi_reduction <maximumf>, %115, %cst_54 [1] : vector<8x16xf32> to vector<8xf32>
    %117 = vector.shape_cast %116 : vector<8xf32> to vector<8x1xf32>
    %118 = vector.broadcast %117 : vector<8x1xf32> to vector<8x16xf32>
    %119 = arith.subf %115, %118 : vector<8x16xf32>
    %120 = math.exp %119 : vector<8x16xf32>
    %cst_55 = arith.constant 0.000000e+00 : f32
    %121 = vector.broadcast %cst_55 : f32 to vector<8x16xf32>
    %122 = arith.select %100, %120, %121 : vector<8x16xi1>, vector<8x16xf32>
    %cst_56 = arith.constant dense<0.000000e+00> : vector<8xf32>
    %123 = vector.multi_reduction <add>, %122, %cst_56 [1] : vector<8x16xf32> to vector<8xf32>
    %124 = vector.shape_cast %123 : vector<8xf32> to vector<8x1xf32>
    %125 = arith.truncf %122 : vector<8x16xf32> to vector<8x16xbf16>
    %cst_57 = arith.constant dense<0.000000e+00> : vector<8x128xf32>
    %126 = tpu.matmul %125, %52, %cst_57 {dimension_numbers = #tpu.dot_dimension_numbers<[1], [0], [0], [1], [0, 0, 1, 1], [], []>} : vector<8x16xbf16>, vector<16x128xbf16>, vector<8x128xf32> -> vector<8x128xf32>
    %cst_58 = arith.constant 1.000000e-30 : f32
    %127 = vector.broadcast %cst_58 : f32 to vector<8x1xf32>
    %128 = arith.maximumf %124, %127 : vector<8x1xf32>
    %129 = tpu.reciprocal %128 {approx = true} : vector<8x1xf32> -> vector<8x1xf32>
    %130 = vector.broadcast %129 : vector<8x1xf32> to vector<8x128xf32>
    %131 = arith.mulf %126, %130 : vector<8x128xf32>
    %132 = vector.broadcast %59 : vector<1x128xf32> to vector<8x128xf32>
    %133 = arith.addf %131, %132 : vector<8x128xf32>
    %134 = tpu.concatenate %96, %133 in 0 : vector<8x128xf32>, vector<8x128xf32> -> vector<16x128xf32>
    %135 = arith.extui %6 : i1 to i32
    %c0_i32_59 = arith.constant 0 : i32
    %136 = arith.cmpi ne, %135, %c0_i32_59 : i32
    scf.if %136 {
      %c0_65 = arith.constant 0 : index
      %c0_66 = arith.constant 0 : index
      %148 = vector.load %arg16[%c0_65, %c0_66] : memref<16x128xf32, #tpu.memory_space<vmem>>, vector<16x128xf32>
      tpu.vector_store %arg16[%c0_65, %c0_66], %134 {strides = array<i32>} : memref<16x128xf32, #tpu.memory_space<vmem>>, vector<16x128xf32>,
    } else {
    }
    %true = arith.constant true
    %137 = arith.xori %6, %true : i1
    %138 = arith.extui %137 : i1 to i32
    %c0_i32_60 = arith.constant 0 : i32
    %139 = arith.cmpi ne, %138, %c0_i32_60 : i32
    scf.if %139 {
      %c0_65 = arith.constant 0 : index
      %c0_66 = arith.constant 0 : index
      %148 = vector.load %arg16[%c0_65, %c0_66] : memref<16x128xf32, #tpu.memory_space<vmem>>, vector<16x128xf32>
      %149 = arith.addf %148, %134 : vector<16x128xf32>
      %c0_67 = arith.constant 0 : index
      %c0_68 = arith.constant 0 : index
      %150 = vector.load %arg16[%c0_67, %c0_68] : memref<16x128xf32, #tpu.memory_space<vmem>>, vector<16x128xf32>
      tpu.vector_store %arg16[%c0_67, %c0_68], %149 {strides = array<i32>} : memref<16x128xf32, #tpu.memory_space<vmem>>, vector<16x128xf32>,
    } else {
    }
    %140 = arith.extui %9 : i1 to i32
    %c0_i32_61 = arith.constant 0 : i32
    %141 = arith.cmpi ne, %140, %c0_i32_61 : i32
    scf.if %141 {
      %c0_65 = arith.constant 0 : index
      %c0_66 = arith.constant 0 : index
      %148 = vector.load %arg16[%c0_65, %c0_66] : memref<16x128xf32, #tpu.memory_space<vmem>>, vector<16x128xf32>
      %cst_67 = arith.constant 0.000000e+00 : f32
      %149 = vector.broadcast %cst_67 : f32 to vector<16x128xf32>
      %150 = arith.maximumf %148, %149 : vector<16x128xf32>
      %151 = arith.truncf %150 : vector<16x128xf32> to vector<16x128xbf16>
      %152 = arith.addi %32, %3 : i32
      %153 = arith.index_cast %152 : i32 to index
      %c0_68 = arith.constant 0 : index
      %c0_69 = arith.constant 0 : index
      %154 = vector.load %arg15[%153, %c0_68, %c0_69] : memref<8x16x128xbf16, #tpu.memory_space<vmem>>, vector<1x16x128xbf16>
      %155 = vector.shape_cast %154 : vector<1x16x128xbf16> to vector<16x128xbf16>
      %156 = vector.shape_cast %151 : vector<16x128xbf16> to vector<1x16x128xbf16>
      tpu.vector_store %arg15[%153, %c0_68, %c0_69], %156 {strides = array<i32>} : memref<8x16x128xbf16, #tpu.memory_space<vmem>>, vector<1x16x128xbf16>,
    } else {
    }
    %c1_i32_62 = arith.constant 1 : i32
    %142 = arith.cmpi eq, %arg0, %c1_i32_62 : i32
    %c0_i32_63 = arith.constant 0 : i32
    %143 = arith.cmpi eq, %3, %c0_i32_63 : i32
    %144 = arith.andi %142, %143 : i1
    %145 = arith.andi %9, %144 : i1
    %146 = arith.extui %145 : i1 to i32
    %c0_i32_64 = arith.constant 0 : i32
    %147 = arith.cmpi ne, %146, %c0_i32_64 : i32
    scf.if %147 {
      %c0_65 = arith.constant 0 : index
      %c0_66 = arith.constant 0 : index
      %148 = vector.load %arg16[%c0_65, %c0_66] : memref<16x128xf32, #tpu.memory_space<vmem>>, vector<16x128xf32>
      %cst_67 = arith.constant 0.000000e+00 : f32
      %149 = vector.broadcast %cst_67 : f32 to vector<16x128xf32>
      %150 = arith.maximumf %148, %149 : vector<16x128xf32>
      %151 = arith.truncf %150 : vector<16x128xf32> to vector<16x128xbf16>
      %c0_68 = arith.constant 0 : index
      %c0_69 = arith.constant 0 : index
      %152 = vector.load %arg12[%c0_68, %c0_69] : memref<128x128xbf16, #tpu.memory_space<vmem>>, vector<128x128xbf16>
      %cst_70 = arith.constant dense<0.000000e+00> : vector<16x128xf32>
      %153 = tpu.matmul %151, %152, %cst_70 {dimension_numbers = #tpu.dot_dimension_numbers<[1], [0], [0], [1], [0, 0, 1, 1], [], []>} : vector<16x128xbf16>, vector<128x128xbf16>, vector<16x128xf32> -> vector<16x128xf32>
      %c0_71 = arith.constant 0 : index
      %c0_72 = arith.constant 0 : index
      %154 = vector.load %arg13[%c0_71, %c0_72] : memref<1x128xf32, #tpu.memory_space<vmem>>, vector<1x128xf32>
      %155 = vector.broadcast %154 : vector<1x128xf32> to vector<16x128xf32>
      %156 = arith.addf %153, %155 : vector<16x128xf32>
      %c0_73 = arith.constant 0 : index
      %c0_74 = arith.constant 0 : index
      %157 = vector.load %arg14[%c0_73, %c0_74] : memref<16x128xf32, #tpu.memory_space<vmem>>, vector<16x128xf32>
      tpu.vector_store %arg14[%c0_73, %c0_74], %156 {strides = array<i32>} : memref<16x128xf32, #tpu.memory_space<vmem>>, vector<16x128xf32>,
    } else {
    }
    return
  }
  func.func @transform_0(%arg0: i32, %arg1: i32, %arg2: memref<7xi32, #tpu.memory_space<smem>>, %arg3: memref<7xi32, #tpu.memory_space<smem>>, %arg4: memref<7xi32, #tpu.memory_space<smem>>, %arg5: memref<7xi32, #tpu.memory_space<smem>>) -> (i32, i32, i32) {
    %c0_i32 = arith.constant 0 : i32
    %c0_i32_0 = arith.constant 0 : i32
    %c0_i32_1 = arith.constant 0 : i32
    %c0_i32_2 = arith.constant 0 : i32
    return %c0_i32, %c0_i32_0, %c0_i32_1 : i32, i32, i32
  }
  func.func @transform_1(%arg0: i32, %arg1: i32, %arg2: memref<7xi32, #tpu.memory_space<smem>>, %arg3: memref<7xi32, #tpu.memory_space<smem>>, %arg4: memref<7xi32, #tpu.memory_space<smem>>, %arg5: memref<7xi32, #tpu.memory_space<smem>>) -> (i32, i32, i32, i32) {
    %c0_i32 = arith.constant 0 : i32
    %c0_i32_0 = arith.constant 0 : i32
    %c0_i32_1 = arith.constant 0 : i32
    return %arg0, %arg1, %c0_i32, %c0_i32_0 : i32, i32, i32, i32
  }
  func.func @transform_2(%arg0: i32, %arg1: i32, %arg2: memref<7xi32, #tpu.memory_space<smem>>, %arg3: memref<7xi32, #tpu.memory_space<smem>>, %arg4: memref<7xi32, #tpu.memory_space<smem>>, %arg5: memref<7xi32, #tpu.memory_space<smem>>) -> (i32, i32, i32, i32) {
    %c0_i32 = arith.constant 0 : i32
    %c0_i32_0 = arith.constant 0 : i32
    %c0_i32_1 = arith.constant 0 : i32
    return %arg0, %arg1, %c0_i32, %c0_i32_0 : i32, i32, i32, i32
  }
  func.func @transform_3(%arg0: i32, %arg1: i32, %arg2: memref<7xi32, #tpu.memory_space<smem>>, %arg3: memref<7xi32, #tpu.memory_space<smem>>, %arg4: memref<7xi32, #tpu.memory_space<smem>>, %arg5: memref<7xi32, #tpu.memory_space<smem>>) -> (i32, i32, i32, i32) {
    %c0_i32 = arith.constant 0 : i32
    %c0_i32_0 = arith.constant 0 : i32
    %c0_i32_1 = arith.constant 0 : i32
    return %arg0, %arg1, %c0_i32, %c0_i32_0 : i32, i32, i32, i32
  }
  func.func @transform_4(%arg0: i32, %arg1: i32, %arg2: memref<7xi32, #tpu.memory_space<smem>>, %arg3: memref<7xi32, #tpu.memory_space<smem>>, %arg4: memref<7xi32, #tpu.memory_space<smem>>, %arg5: memref<7xi32, #tpu.memory_space<smem>>) -> (i32, i32, i32, i32) {
    %c0_i32 = arith.constant 0 : i32
    %c0_i32_0 = arith.constant 0 : i32
    %c0_i32_1 = arith.constant 0 : i32
    return %arg0, %arg1, %c0_i32, %c0_i32_0 : i32, i32, i32, i32
  }
  func.func @transform_5(%arg0: i32, %arg1: i32, %arg2: memref<7xi32, #tpu.memory_space<smem>>, %arg3: memref<7xi32, #tpu.memory_space<smem>>, %arg4: memref<7xi32, #tpu.memory_space<smem>>, %arg5: memref<7xi32, #tpu.memory_space<smem>>) -> (i32, i32, i32) {
    %c0_i32 = arith.constant 0 : i32
    %c0_i32_0 = arith.constant 0 : i32
    %c0_i32_1 = arith.constant 0 : i32
    return %arg1, %c0_i32, %c0_i32_0 : i32, i32, i32
  }
  func.func @transform_6(%arg0: i32, %arg1: i32, %arg2: memref<7xi32, #tpu.memory_space<smem>>, %arg3: memref<7xi32, #tpu.memory_space<smem>>, %arg4: memref<7xi32, #tpu.memory_space<smem>>, %arg5: memref<7xi32, #tpu.memory_space<smem>>) -> (i32, i32) {
    %c0_i32 = arith.constant 0 : i32
    %c0_i32_0 = arith.constant 0 : i32
    %c0_i32_1 = arith.constant 0 : i32
    return %c0_i32, %c0_i32_0 : i32, i32
  }
  func.func @transform_7(%arg0: i32, %arg1: i32, %arg2: memref<7xi32, #tpu.memory_space<smem>>, %arg3: memref<7xi32, #tpu.memory_space<smem>>, %arg4: memref<7xi32, #tpu.memory_space<smem>>, %arg5: memref<7xi32, #tpu.memory_space<smem>>) -> (i32, i32) {
    %c0_i32 = arith.constant 0 : i32
    %c0_i32_0 = arith.constant 0 : i32
    %c0_i32_1 = arith.constant 0 : i32
    return %c0_i32, %c0_i32_0 : i32, i32
  }
  func.func @transform_8(%arg0: i32, %arg1: i32, %arg2: memref<7xi32, #tpu.memory_space<smem>>, %arg3: memref<7xi32, #tpu.memory_space<smem>>, %arg4: memref<7xi32, #tpu.memory_space<smem>>, %arg5: memref<7xi32, #tpu.memory_space<smem>>) -> (i32, i32) {
    %c0_i32 = arith.constant 0 : i32
    %c0_i32_0 = arith.constant 0 : i32
    %c0_i32_1 = arith.constant 0 : i32
    return %c0_i32, %c0_i32_0 : i32, i32
  }
}

</mosaic_0001>

<llo_original>
// kernel: kg_hetero_gnn_forward.1
$region0: #{kg_hetero_gnn_forward.1}
  #allocation0 [shape = 'u32[]', space=smem, size = 0x4, offset = 0x4, fixed_abs, tag = 'smem constant byte address 0x4 - core index']
  #allocation1 [shape = 'u32[144,128]{1,0:T(1,128)}', space=vmem, size = 0x12000, scoped, tag = 'internal scratch']
  #allocation2 [shape = 'bf16[8,16,128]{2,1,0:T(16,128)(2,1)}', space=vmem, size = 0x8000, scoped, tag = 'scratch operand']
  #allocation3 [shape = 'f32[16,128]{1,0:T(8,128)}', space=vmem, size = 0x2000, scoped, tag = 'scratch operand']
  #allocation4 [shape = 's32[1]{0}', space=sflag, size = 0x4, scoped, tag = 'scoped memory for kg_hetero_gnn_forward.1']
  #allocation5 [shape = 'u8[512]{0}', space=smem, size = 0x200, scoped, tag = 'prefetched SMEM operand 0']
  #allocation6 [shape = 'u8[512]{0}', space=smem, size = 0x200, scoped, tag = 'prefetched SMEM operand 1']
  #allocation7 [shape = 'u8[512]{0}', space=smem, size = 0x200, scoped, tag = 'prefetched SMEM operand 2']
  #allocation8 [shape = 'u8[512]{0}', space=smem, size = 0x200, scoped, tag = 'prefetched SMEM operand 3']
  %s0 = inlined_call_operand.vmem [shape: s32[7], index: 0, kind: input, shape index: {}]
  %s1 = inlined_call_operand.vmem [shape: s32[7], index: 1, kind: input, shape index: {}]
  %s2 = inlined_call_operand.vmem [shape: s32[7], index: 2, kind: input, shape index: {}]
  %s3 = inlined_call_operand.vmem [shape: s32[7], index: 3, kind: input, shape index: {}]
  %s4 = inlined_call_operand.hbm [shape: bf16[4,16,128], index: 4, kind: input, shape index: {}]
  %s5 = inlined_call_operand.hbm [shape: bf16[2,7,128,128], index: 5, kind: input, shape index: {}]
  %s6 = inlined_call_operand.hbm [shape: bf16[2,7,128,128], index: 6, kind: input, shape index: {}]
  %s7 = inlined_call_operand.hbm [shape: f32[2,7,1,128], index: 7, kind: input, shape index: {}]
  %s8 = inlined_call_operand.hbm [shape: f32[2,7,1,128], index: 8, kind: input, shape index: {}]
  %s9 = inlined_call_operand.hbm [shape: f32[7,16,16], index: 9, kind: input, shape index: {}]
  %s10 = inlined_call_operand.hbm [shape: bf16[128,128], index: 10, kind: input, shape index: {}]
  %s11 = inlined_call_operand.vmem [shape: f32[1,128], index: 11, kind: input, shape index: {}]
  %s12 = inlined_call_operand.hbm [shape: f32[16,128], index: 12, kind: output, shape index: {}]
  %s13 = sld [smem:[#allocation0]]
  $region113: #{kg_hetero_gnn_forward.1} parent=0
    _
  %s15 = ssub.s32 1, %s13
  %s16 = scalar_select 0, %s15, %s13
  %s17 = sshll.u32 %s0, 4
  %s18 = int_to_ptr.vmem [resolvable:$true] %s17
  %20 = dma.vmem_to_smem %s18, 16, [#allocation5], [#allocation4]
  %s21 = sshll.u32 %s1, 4
  %s22 = int_to_ptr.vmem [resolvable:$true] %s21
  %24 = dma.vmem_to_smem %s22, 16, [#allocation6], [#allocation4]
  %s25 = sshll.u32 %s2, 4
  %s26 = int_to_ptr.vmem [resolvable:$true] %s25
  %28 = dma.vmem_to_smem %s26, 16, [#allocation7], [#allocation4]
  %s29 = sshll.u32 %s3, 4
  %s30 = int_to_ptr.vmem [resolvable:$true] %s29
  %32 = dma.vmem_to_smem %s30, 16, [#allocation8], [#allocation4]
  %33 = dma.done [#allocation4], 64
  %34 = sfence
  $region1: #{kg_hetero_gnn_forward.1} parent=0
    #allocation9 [shape = 'u8[16384]{0}', space=vmem, size = 0x4000, scoped, tag = 'input window, operand 4, single buffered']
    #allocation10 [shape = 's32[2]{0}', space=sflag, size = 0x8, scoped, tag = 'scoped memory for kg_hetero_gnn_forward.1']
    #allocation11 [shape = 's32[2]{0}', space=sflag, size = 0x8, scoped, tag = 'scoped memory for kg_hetero_gnn_forward.1']
    #allocation12 [shape = 'u8[65536]{0}', space=vmem, size = 0x10000, scoped, tag = 'input window, operand 5']
    #allocation13 [shape = 's32[2]{0}', space=sflag, size = 0x8, scoped, tag = 'scoped memory for kg_hetero_gnn_forward.1']
    #allocation14 [shape = 'u8[65536]{0}', space=vmem, size = 0x10000, scoped, tag = 'input window, operand 6']
    #allocation15 [shape = 'u8[1024]{0}', space=vmem, size = 0x400, scoped, tag = 'input window, operand 7']
    #allocation16 [shape = 's32[2]{0}', space=sflag, size = 0x8, scoped, tag = 'scoped memory for kg_hetero_gnn_forward.1']
    #allocation17 [shape = 'u8[1024]{0}', space=vmem, size = 0x400, scoped, tag = 'input window, operand 8']
    #allocation18 [shape = 'u8[16384]{0}', space=vmem, size = 0x4000, scoped, tag = 'input window, operand 9']
    #allocation19 [shape = 's32[2]{0}', space=sflag, size = 0x8, scoped, tag = 'scoped memory for kg_hetero_gnn_forward.1']
    #allocation20 [shape = 'u8[32768]{0}', space=vmem, size = 0x8000, scoped, tag = 'input window, operand 10, single buffered']
    #allocation21 [shape = 'u8[8192]{0}', space=vmem, size = 0x2000, scoped, tag = 'output window, operand 0, single buffered']
    %35 = vsyncpa [#allocation10], 0
    %36 = vsyncpa [#allocation13], 0
    %s37 = scalar_lea.sflag [#allocation13], 1
    %38 = vsyncpa %s37, 0
    %39 = vsyncpa [#allocation16], 0
    %s40 = scalar_lea.sflag [#allocation16], 1
    %41 = vsyncpa %s40, 0
    %42 = vsyncpa [#allocation19], 0
    %s43 = scalar_lea.sflag [#allocation19], 1
    %44 = vsyncpa %s43, 0
    %45 = vsyncpa [#allocation11], 0
    loop: start=0, step=1, limit=16
    $region2: #{kg_hetero_gnn_forward.1} parent=1 // loop_pre_header
      _
    $region3: #{kg_hetero_gnn_forward.1} parent=1 // loop_header
      %s47 = sphi 0, %s51
      %p48 = scmp.ge.s32.totalorder %s47, 16
      %s54 = sphi 0, %s66
      %s55 = sphi 0, %s62
      %s56 = sphi 0, %s54
      %s57 = sphi 0, %s55
      %s58 = sphi 0, %s56
      %s59 = sphi 0, %s57
      %s67 = sphi 0, %s67
      %s69 = sphi 0, %s67
      %s70 = sphi 0, %s69
      %s84 = sphi 0, %s70
      %s92 = sphi 0, %s94
      %s95 = sphi 0, %s92
      %s96 = sphi 0, %s95
      %s112 = sphi 0, %s96
      %s120 = sphi 0, %s122
      %s123 = sphi 0, %s120
      %s124 = sphi 0, %s123
      %s140 = sphi 0, %s124
      %s148 = sphi 0, %s150
      %s151 = sphi 0, %s148
      %s152 = sphi 0, %s151
      %s168 = sphi 0, %s152
      %s176 = sphi 0, %s178
      %s179 = sphi 0, %s176
      %s180 = sphi 0, %s179
      %s196 = sphi 0, %s180
      %s202 = sphi 0, %s204
      %s205 = sphi 0, %s202
      %s206 = sphi 0, %s205
      %s222 = sphi 0, %s206
      %s226 = sphi 0, %s226
      %s228 = sphi 0, %s226
      %s229 = sphi 0, %s228
      %s243 = sphi 0, %s229
      %s247 = sphi 0, %s247
      %s249 = sphi 0, %s247
      %s250 = sphi 0, %s249
      %s264 = sphi 0, %s250
      %s268 = sphi 0, %s268
      %s270 = sphi 0, %s268
      %s271 = sphi 0, %s270
      %s285 = sphi 0, %s271
    $region4: #{kg_hetero_gnn_forward.1} parent=1 // loop_header_branch
      %50 = sbr.rel (%p48) target = $region8
    $region5: #{kg_hetero_gnn_forward.1} parent=1 // loop_body
      %s52 = ssub.s32 %s47, 1
      %s53 = ssub.s32 %s47, 2
      %s60 = sadd.s32 1, %s55
      %p61 = scmp.ge.s32.totalorder %s60, 7
      %s62 = scalar_select %p61, 0, %s60
      %s63 = sadd.s32 1, %s54
      %s64 = scalar_select %p61, %s63, %s54
      %p65 = scmp.ge.s32.totalorder %s64, 2
      %s66 = scalar_select %p65, 0, %s64
      %s68 = sadd.s32 %s67, 1
      %p71 = scmp.eq.s32.totalorder %s47, 13
      %p72 = scmp.ne.s32.totalorder %s67, %s69
      %p73 = scmp.eq.s32.totalorder %s47, 0
      %p74 = por %p72, %p73
      %p75 = scmp.ne.s32.totalorder %s67, %s69
      %p76 = scmp.eq.s32.totalorder %s52, 13
      %p77 = por %p75, %p76
      %p78 = scmp.ne.s32.totalorder %s69, %s70
      %p79 = scmp.eq.s32.totalorder %s52, 0
      %p80 = por %p78, %p79
      %p81 = scmp.ne.s32.totalorder %s69, %s70
      %p82 = scmp.eq.s32.totalorder %s53, 13
      %p83 = por %p81, %p82
      %p85 = scmp.ne.s32.totalorder %s70, %s84
      %p86 = scmp.eq.s32.totalorder %s53, 0
      %p87 = por %p85, %p86
      %s88 = ssub.s32 %s54, %s66
      %s89 = ssub.s32 %s55, %s62
      %s90 = sor.u32 %s88, %s89
      %p91 = scmp.eq.s32.totalorder %s90, 0
      %s93 = sadd.s32 %s92, 1
      %s94 = scalar_select %p91, %s92, %s93
      %p97 = pneg %p91
      %p98 = scmp.eq.s32.totalorder %s47, 13
      %p99 = por %p97, %p98
      %p100 = scmp.ne.s32.totalorder %s92, %s95
      %p101 = scmp.eq.s32.totalorder %s47, 0
      %p102 = por %p100, %p101
      %p103 = scmp.ne.s32.totalorder %s92, %s95
      %p104 = scmp.eq.s32.totalorder %s52, 13
      %p105 = por %p103, %p104
      %p106 = scmp.ne.s32.totalorder %s95, %s96
      %p107 = scmp.eq.s32.totalorder %s52, 0
      %p108 = por %p106, %p107
      %p109 = scmp.ne.s32.totalorder %s95, %s96
      %p110 = scmp.eq.s32.totalorder %s53, 13
      %p111 = por %p109, %p110
      %p113 = scmp.ne.s32.totalorder %s96, %s112
      %p114 = scmp.eq.s32.totalorder %s53, 0
      %p115 = por %p113, %p114
      %s116 = ssub.s32 %s54, %s66
      %s117 = ssub.s32 %s55, %s62
      %s118 = sor.u32 %s116, %s117
      %p119 = scmp.eq.s32.totalorder %s118, 0
      %s121 = sadd.s32 %s120, 1
      %s122 = scalar_select %p119, %s120, %s121
      %p125 = pneg %p119
      %p126 = scmp.eq.s32.totalorder %s47, 13
      %p127 = por %p125, %p126
      %p128 = scmp.ne.s32.totalorder %s120, %s123
      %p129 = scmp.eq.s32.totalorder %s47, 0
      %p130 = por %p128, %p129
      %p131 = scmp.ne.s32.totalorder %s120, %s123
      %p132 = scmp.eq.s32.totalorder %s52, 13
      %p133 = por %p131, %p132
      %p134 = scmp.ne.s32.totalorder %s123, %s124
      %p135 = scmp.eq.s32.totalorder %s52, 0
      %p136 = por %p134, %p135
      %p137 = scmp.ne.s32.totalorder %s123, %s124
      %p138 = scmp.eq.s32.totalorder %s53, 13
      %p139 = por %p137, %p138
      %p141 = scmp.ne.s32.totalorder %s124, %s140
      %p142 = scmp.eq.s32.totalorder %s53, 0
      %p143 = por %p141, %p142
      %s144 = ssub.s32 %s54, %s66
      %s145 = ssub.s32 %s55, %s62
      %s146 = sor.u32 %s144, %s145
      %p147 = scmp.eq.s32.totalorder %s146, 0
      %s149 = sadd.s32 %s148, 1
      %s150 = scalar_select %p147, %s148, %s149
      %p153 = pneg %p147
      %p154 = scmp.eq.s32.totalorder %s47, 13
      %p155 = por %p153, %p154
      %p156 = scmp.ne.s32.totalorder %s148, %s151
      %p157 = scmp.eq.s32.totalorder %s47, 0
      %p158 = por %p156, %p157
      %p159 = scmp.ne.s32.totalorder %s148, %s151
      %p160 = scmp.eq.s32.totalorder %s52, 13
      %p161 = por %p159, %p160
      %p162 = scmp.ne.s32.totalorder %s151, %s152
      %p163 = scmp.eq.s32.totalorder %s52, 0
      %p164 = por %p162, %p163
      %p165 = scmp.ne.s32.totalorder %s151, %s152
      %p166 = scmp.eq.s32.totalorder %s53, 13
      %p167 = por %p165, %p166
      %p169 = scmp.ne.s32.totalorder %s152, %s168
      %p170 = scmp.eq.s32.totalorder %s53, 0
      %p171 = por %p169, %p170
      %s172 = ssub.s32 %s54, %s66
      %s173 = ssub.s32 %s55, %s62
      %s174 = sor.u32 %s172, %s173
      %p175 = scmp.eq.s32.totalorder %s174, 0
      %s177 = sadd.s32 %s176, 1
      %s178 = scalar_select %p175, %s176, %s177
      %p181 = pneg %p175
      %p182 = scmp.eq.s32.totalorder %s47, 13
      %p183 = por %p181, %p182
      %p184 = scmp.ne.s32.totalorder %s176, %s179
      %p185 = scmp.eq.s32.totalorder %s47, 0
      %p186 = por %p184, %p185
      %p187 = scmp.ne.s32.totalorder %s176, %s179
      %p188 = scmp.eq.s32.totalorder %s52, 13
      %p189 = por %p187, %p188
      %p190 = scmp.ne.s32.totalorder %s179, %s180
      %p191 = scmp.eq.s32.totalorder %s52, 0
      %p192 = por %p190, %p191
      %p193 = scmp.ne.s32.totalorder %s179, %s180
      %p194 = scmp.eq.s32.totalorder %s53, 13
      %p195 = por %p193, %p194
      %p197 = scmp.ne.s32.totalorder %s180, %s196
      %p198 = scmp.eq.s32.totalorder %s53, 0
      %p199 = por %p197, %p198
      %s200 = ssub.s32 %s55, %s62
      %p201 = scmp.eq.s32.totalorder %s200, 0
      %s203 = sadd.s32 %s202, 1
      %s204 = scalar_select %p201, %s202, %s203
      %p207 = pneg %p201
      %p208 = scmp.eq.s32.totalorder %s47, 13
      %p209 = por %p207, %p208
      %p210 = scmp.ne.s32.totalorder %s202, %s205
      %p211 = scmp.eq.s32.totalorder %s47, 0
      %p212 = por %p210, %p211
      %p213 = scmp.ne.s32.totalorder %s202, %s205
      %p214 = scmp.eq.s32.totalorder %s52, 13
      %p215 = por %p213, %p214
      %p216 = scmp.ne.s32.totalorder %s205, %s206
      %p217 = scmp.eq.s32.totalorder %s52, 0
      %p218 = por %p216, %p217
      %p219 = scmp.ne.s32.totalorder %s205, %s206
      %p220 = scmp.eq.s32.totalorder %s53, 13
      %p221 = por %p219, %p220
      %p223 = scmp.ne.s32.totalorder %s206, %s222
      %p224 = scmp.eq.s32.totalorder %s53, 0
      %p225 = por %p223, %p224
      %s227 = sadd.s32 %s226, 1
      %p230 = scmp.eq.s32.totalorder %s47, 13
      %p231 = scmp.ne.s32.totalorder %s226, %s228
      %p232 = scmp.eq.s32.totalorder %s47, 0
      %p233 = por %p231, %p232
      %p234 = scmp.ne.s32.totalorder %s226, %s228
      %p235 = scmp.eq.s32.totalorder %s52, 13
      %p236 = por %p234, %p235
      %p237 = scmp.ne.s32.totalorder %s228, %s229
      %p238 = scmp.eq.s32.totalorder %s52, 0
      %p239 = por %p237, %p238
      %p240 = scmp.ne.s32.totalorder %s228, %s229
      %p241 = scmp.eq.s32.totalorder %s53, 13
      %p242 = por %p240, %p241
      %p244 = scmp.ne.s32.totalorder %s229, %s243
      %p245 = scmp.eq.s32.totalorder %s53, 0
      %p246 = por %p244, %p245
      %s248 = sadd.s32 %s247, 1
      %p251 = scmp.eq.s32.totalorder %s47, 13
      %p252 = scmp.ne.s32.totalorder %s247, %s249
      %p253 = scmp.eq.s32.totalorder %s47, 0
      %p254 = por %p252, %p253
      %p255 = scmp.ne.s32.totalorder %s247, %s249
      %p256 = scmp.eq.s32.totalorder %s52, 13
      %p257 = por %p255, %p256
      %p258 = scmp.ne.s32.totalorder %s249, %s250
      %p259 = scmp.eq.s32.totalorder %s52, 0
      %p260 = por %p258, %p259
      %p261 = scmp.ne.s32.totalorder %s249, %s250
      %p262 = scmp.eq.s32.totalorder %s53, 13
      %p263 = por %p261, %p262
      %p265 = scmp.ne.s32.totalorder %s250, %s264
      %p266 = scmp.eq.s32.totalorder %s53, 0
      %p267 = por %p265, %p266
      %s269 = sadd.s32 %s268, 1
      %p272 = scmp.eq.s32.totalorder %s47, 13
      %p273 = scmp.ne.s32.totalorder %s268, %s270
      %p274 = scmp.eq.s32.totalorder %s47, 0
      %p275 = por %p273, %p274
      %p276 = scmp.ne.s32.totalorder %s268, %s270
      %p277 = scmp.eq.s32.totalorder %s52, 13
      %p278 = por %p276, %p277
      %p279 = scmp.ne.s32.totalorder %s270, %s271
      %p280 = scmp.eq.s32.totalorder %s52, 0
      %p281 = por %p279, %p280
      %p282 = scmp.ne.s32.totalorder %s270, %s271
      %p283 = scmp.eq.s32.totalorder %s53, 13
      %p284 = por %p282, %p283
      %p286 = scmp.ne.s32.totalorder %s271, %s285
      %p287 = scmp.eq.s32.totalorder %s53, 0
      %p288 = por %p286, %p287
      %p289 = scmp.le.s32.totalorder 1, %s47
      %p290 = scmp.lt.s32.totalorder %s47, 15
      %p291 = pnand %p289, %p290
      %p292 = pneg %p291
      // Predicated region
      $region9: #{kg_hetero_gnn_forward.1} parent=5 // pred_check
        _
      $region10: #{kg_hetero_gnn_forward.1} parent=5 // pred_check_branch
        %294 = sbr.rel (%p291) target = $region12
      $region11: #{kg_hetero_gnn_forward.1} parent=5 // pred_region
        %s295 = ssub.s32 %s47, 1
        // Predicated region
        $region13: #{kg_hetero_gnn_forward.1} parent=11 // pred_check
          %p296 = pneg %p80
        $region14: #{kg_hetero_gnn_forward.1} parent=11 // pred_check_branch
          %298 = sbr.rel (%p296) target = $region16
        $region15: #{kg_hetero_gnn_forward.1} parent=11 // pred_region
          %s300 = ssub.s32 512, 512
          %301 = vsyncadd [#allocation10], %s300
          %s302 = sshll.u32 [#allocation9], 4
          %s303 = int_to_ptr.vmem [resolvable:$true] %s302
          %308 = dma.hbm_to_vmem [thread:$0]  %s4, 512, %s303, [#allocation10], 64, 64, 4
        $region16: #{kg_hetero_gnn_forward.1} parent=11 // pred_fallthru
          _
        // Predicated region
        $region17: #{kg_hetero_gnn_forward.1} parent=11 // pred_check
          %p309 = pneg %p239
        $region18: #{kg_hetero_gnn_forward.1} parent=11 // pred_check_branch
          %311 = sbr.rel (%p309) target = $region20
        $region19: #{kg_hetero_gnn_forward.1} parent=11 // pred_region
          %s313 = ssub.s32 1024, 1024
          %314 = vsyncadd [#allocation19], %s313
          %s315 = sshll.u32 [#allocation20], 4
          %s316 = int_to_ptr.vmem [resolvable:$true] %s315
          %321 = dma.hbm_to_vmem [thread:$0]  %s10, 1024, %s316, [#allocation19], 64, 64, 4
        $region20: #{kg_hetero_gnn_forward.1} parent=11 // pred_fallthru
          _
        // Predicated region
        $region21: #{kg_hetero_gnn_forward.1} parent=11 // pred_check
          %p322 = pneg %p260
        $region22: #{kg_hetero_gnn_forward.1} parent=11 // pred_check_branch
          %324 = sbr.rel (%p322) target = $region24
        $region23: #{kg_hetero_gnn_forward.1} parent=11 // pred_region
          _
        $region24: #{kg_hetero_gnn_forward.1} parent=11 // pred_fallthru
          _
      $region12: #{kg_hetero_gnn_forward.1} parent=5 // pred_fallthru
        _
      %p325 = scmp.lt.s32.totalorder %s47, 14
      // Predicated region
      $region25: #{kg_hetero_gnn_forward.1} parent=5 // pred_check
        %p326 = pneg %p325
      $region26: #{kg_hetero_gnn_forward.1} parent=5 // pred_check_branch
        %328 = sbr.rel (%p326) target = $region28
      $region27: #{kg_hetero_gnn_forward.1} parent=5 // pred_region
        // Predicated region
        $region29: #{kg_hetero_gnn_forward.1} parent=27 // pred_check
          %p329 = pneg %p102
        $region30: #{kg_hetero_gnn_forward.1} parent=27 // pred_check_branch
          %331 = sbr.rel (%p329) target = $region32
        $region31: #{kg_hetero_gnn_forward.1} parent=27 // pred_region
          %s332 = sand.u32 %s47, 1
          %s333 = scalar_lea.sflag [#allocation13], %s332
          %s334 = sand.u32 %s92, 1
          %s335 = smul.addr %s334, 64
          %s336 = scalar_lea.vmem [#allocation12], %s335
          %s338 = ssub.s32 1024, 1024
          %339 = vsyncadd %s333, %s338
          %s340 = smul.addr %s55, 16
          %s341 = smul.addr %s54, 112
          %s342 = sadd.s32 %s340, %s341
          %s343 = smul.addr %s342, 64
          %s344 = scalar_lea.hbm %s5, %s343
          %s345 = sshll.u32 %s336, 4
          %s346 = int_to_ptr.vmem [resolvable:$true] %s345
          %351 = dma.hbm_to_vmem [thread:$0]  %s344, 1024, %s346, %s333, 64, 64, 4
        $region32: #{kg_hetero_gnn_forward.1} parent=27 // pred_fallthru
          _
        // Predicated region
        $region33: #{kg_hetero_gnn_forward.1} parent=27 // pred_check
          %p352 = pneg %p130
        $region34: #{kg_hetero_gnn_forward.1} parent=27 // pred_check_branch
          %354 = sbr.rel (%p352) target = $region36
        $region35: #{kg_hetero_gnn_forward.1} parent=27 // pred_region
          %s355 = sand.u32 %s47, 1
          %s356 = scalar_lea.sflag [#allocation13], %s355
          %s357 = sand.u32 %s120, 1
          %s358 = smul.addr %s357, 64
          %s359 = scalar_lea.vmem [#allocation14], %s358
          %s361 = ssub.s32 1024, 1024
          %362 = vsyncadd %s356, %s361
          %s363 = smul.addr %s55, 16
          %s364 = smul.addr %s54, 112
          %s365 = sadd.s32 %s363, %s364
          %s366 = smul.addr %s365, 64
          %s367 = scalar_lea.hbm %s6, %s366
          %s368 = sshll.u32 %s359, 4
          %s369 = int_to_ptr.vmem [resolvable:$true] %s368
          %374 = dma.hbm_to_vmem [thread:$0]  %s367, 1024, %s369, %s356, 64, 64, 4
        $region36: #{kg_hetero_gnn_forward.1} parent=27 // pred_fallthru
          _
        // Predicated region
        $region37: #{kg_hetero_gnn_forward.1} parent=27 // pred_check
          %p375 = pneg %p158
        $region38: #{kg_hetero_gnn_forward.1} parent=27 // pred_check_branch
          %377 = sbr.rel (%p375) target = $region40
        $region39: #{kg_hetero_gnn_forward.1} parent=27 // pred_region
          %s378 = sand.u32 %s47, 1
          %s379 = scalar_lea.sflag [#allocation16], %s378
          %s380 = sand.u32 %s148, 1
          %s381 = scalar_lea.vmem [#allocation15], %s380
          %s383 = ssub.s32 16, 16
          %384 = vsyncadd %s379, %s383
          %s385 = smul.addr %s54, 7
          %s386 = sadd.s32 %s55, %s385
          %s387 = smul.addr %s386, 16
          %s388 = scalar_lea.hbm %s7, %s387
          %s390 = sshll.u32 %s381, 4
          %s391 = int_to_ptr.vmem [resolvable:$true] %s390
          %393 = dma.hbm_to_vmem [thread:$0]  %s388, 16, %s391, %s379
        $region40: #{kg_hetero_gnn_forward.1} parent=27 // pred_fallthru
          _
        // Predicated region
        $region41: #{kg_hetero_gnn_forward.1} parent=27 // pred_check
          %p394 = pneg %p186
        $region42: #{kg_hetero_gnn_forward.1} parent=27 // pred_check_branch
          %396 = sbr.rel (%p394) target = $region44
        $region43: #{kg_hetero_gnn_forward.1} parent=27 // pred_region
          %s397 = sand.u32 %s47, 1
          %s398 = scalar_lea.sflag [#allocation16], %s397
          %s399 = sand.u32 %s176, 1
          %s400 = scalar_lea.vmem [#allocation17], %s399
          %s402 = ssub.s32 16, 16
          %403 = vsyncadd %s398, %s402
          %s404 = smul.addr %s54, 7
          %s405 = sadd.s32 %s55, %s404
          %s406 = smul.addr %s405, 16
          %s407 = scalar_lea.hbm %s8, %s406
          %s409 = sshll.u32 %s400, 4
          %s410 = int_to_ptr.vmem [resolvable:$true] %s409
          %412 = dma.hbm_to_vmem [thread:$0]  %s407, 16, %s410, %s398
        $region44: #{kg_hetero_gnn_forward.1} parent=27 // pred_fallthru
          _
        // Predicated region
        $region45: #{kg_hetero_gnn_forward.1} parent=27 // pred_check
          %p413 = pneg %p212
        $region46: #{kg_hetero_gnn_forward.1} parent=27 // pred_check_branch
          %415 = sbr.rel (%p413) target = $region48
        $region47: #{kg_hetero_gnn_forward.1} parent=27 // pred_region
          %s416 = sand.u32 %s47, 1
          %s417 = scalar_lea.sflag [#allocation19], %s416
          %s418 = sand.u32 %s202, 1
          %s419 = smul.addr %s418, 16
          %s420 = scalar_lea.vmem [#allocation18], %s419
          %s422 = ssub.s32 256, 256
          %423 = vsyncadd %s417, %s422
          %s424 = smul.addr %s55, 2
          %s425 = smul.addr %s424, 128
          %s426 = scalar_lea.hbm %s9, %s425
          %s427 = sshll.u32 %s420, 4
          %s428 = int_to_ptr.vmem [resolvable:$true] %s427
          %433 = dma.hbm_to_vmem [thread:$0]  %s426, 256, %s428, %s417, 128, 128, 8
        $region48: #{kg_hetero_gnn_forward.1} parent=27 // pred_fallthru
          _
      $region28: #{kg_hetero_gnn_forward.1} parent=5 // pred_fallthru
        _
      %p434 = scmp.le.s32.totalorder 1, %s47
      %p435 = scmp.lt.s32.totalorder %s47, 15
      %p436 = pnand %p434, %p435
      %p437 = pneg %p436
      // Predicated region
      $region49: #{kg_hetero_gnn_forward.1} parent=5 // pred_check
        _
      $region50: #{kg_hetero_gnn_forward.1} parent=5 // pred_check_branch
        %439 = sbr.rel (%p436) target = $region52
      $region51: #{kg_hetero_gnn_forward.1} parent=5 // pred_region
        %s440 = ssub.s32 %s47, 1
        // Predicated region
        $region53: #{kg_hetero_gnn_forward.1} parent=51 // pred_check
          %p441 = pneg %p80
        $region54: #{kg_hetero_gnn_forward.1} parent=51 // pred_check_branch
          %443 = sbr.rel (%p441) target = $region56
        $region55: #{kg_hetero_gnn_forward.1} parent=51 // pred_region
          %444 = dma.done [#allocation10], 512
        $region56: #{kg_hetero_gnn_forward.1} parent=51 // pred_fallthru
          _
        %s445 = sand.u32 %s52, 1
        %s446 = scalar_lea.sflag [#allocation13], %s445
        %s447 = sand.u32 %s95, 1
        %s448 = smul.addr %s447, 64
        %s449 = scalar_lea.vmem [#allocation12], %s448
        // Predicated region
        $region57: #{kg_hetero_gnn_forward.1} parent=51 // pred_check
          %p450 = pneg %p108
        $region58: #{kg_hetero_gnn_forward.1} parent=51 // pred_check_branch
          %452 = sbr.rel (%p450) target = $region60
        $region59: #{kg_hetero_gnn_forward.1} parent=51 // pred_region
          %453 = dma.done %s446, 1024
        $region60: #{kg_hetero_gnn_forward.1} parent=51 // pred_fallthru
          _
        %s454 = sand.u32 %s52, 1
        %s455 = scalar_lea.sflag [#allocation13], %s454
        %s456 = sand.u32 %s123, 1
        %s457 = smul.addr %s456, 64
        %s458 = scalar_lea.vmem [#allocation14], %s457
        // Predicated region
        $region61: #{kg_hetero_gnn_forward.1} parent=51 // pred_check
          %p459 = pneg %p136
        $region62: #{kg_hetero_gnn_forward.1} parent=51 // pred_check_branch
          %461 = sbr.rel (%p459) target = $region64
        $region63: #{kg_hetero_gnn_forward.1} parent=51 // pred_region
          %462 = dma.done %s455, 1024
        $region64: #{kg_hetero_gnn_forward.1} parent=51 // pred_fallthru
          _
        %s463 = sand.u32 %s52, 1
        %s464 = scalar_lea.sflag [#allocation16], %s463
        %s465 = sand.u32 %s151, 1
        %s466 = scalar_lea.vmem [#allocation15], %s465
        // Predicated region
        $region65: #{kg_hetero_gnn_forward.1} parent=51 // pred_check
          %p467 = pneg %p164
        $region66: #{kg_hetero_gnn_forward.1} parent=51 // pred_check_branch
          %469 = sbr.rel (%p467) target = $region68
        $region67: #{kg_hetero_gnn_forward.1} parent=51 // pred_region
          %470 = dma.done %s464, 16
        $region68: #{kg_hetero_gnn_forward.1} parent=51 // pred_fallthru
          _
        %s471 = sand.u32 %s52, 1
        %s472 = scalar_lea.sflag [#allocation16], %s471
        %s473 = sand.u32 %s179, 1
        %s474 = scalar_lea.vmem [#allocation17], %s473
        // Predicated region
        $region69: #{kg_hetero_gnn_forward.1} parent=51 // pred_check
          %p475 = pneg %p192
        $region70: #{kg_hetero_gnn_forward.1} parent=51 // pred_check_branch
          %477 = sbr.rel (%p475) target = $region72
        $region71: #{kg_hetero_gnn_forward.1} parent=51 // pred_region
          %478 = dma.done %s472, 16
        $region72: #{kg_hetero_gnn_forward.1} parent=51 // pred_fallthru
          _
        %s479 = sand.u32 %s52, 1
        %s480 = scalar_lea.sflag [#allocation19], %s479
        %s481 = sand.u32 %s205, 1
        %s482 = smul.addr %s481, 16
        %s483 = scalar_lea.vmem [#allocation18], %s482
        // Predicated region
        $region73: #{kg_hetero_gnn_forward.1} parent=51 // pred_check
          %p484 = pneg %p218
        $region74: #{kg_hetero_gnn_forward.1} parent=51 // pred_check_branch
          %486 = sbr.rel (%p484) target = $region76
        $region75: #{kg_hetero_gnn_forward.1} parent=51 // pred_region
          %487 = dma.done %s480, 256
        $region76: #{kg_hetero_gnn_forward.1} parent=51 // pred_fallthru
          _
        // Predicated region
        $region77: #{kg_hetero_gnn_forward.1} parent=51 // pred_check
          %p488 = pneg %p239
        $region78: #{kg_hetero_gnn_forward.1} parent=51 // pred_check_branch
          %490 = sbr.rel (%p488) target = $region80
        $region79: #{kg_hetero_gnn_forward.1} parent=51 // pred_region
          %491 = dma.done [#allocation19], 1024
        $region80: #{kg_hetero_gnn_forward.1} parent=51 // pred_fallthru
          _
        %p492 = pneg %p80
        %p493 = pneg %p77
        %s494 = sand.u32 %s52, 1
        %s495 = scalar_lea.sflag [#allocation13], %s494
        %s496 = sand.u32 %s95, 1
        %s497 = smul.addr %s496, 64
        %s498 = scalar_lea.vmem [#allocation12], %s497
        %p499 = pneg %p108
        %p500 = pneg %p105
        %s501 = sand.u32 %s52, 1
        %s502 = scalar_lea.sflag [#allocation13], %s501
        %s503 = sand.u32 %s123, 1
        %s504 = smul.addr %s503, 64
        %s505 = scalar_lea.vmem [#allocation14], %s504
        %p506 = pneg %p136
        %p507 = pneg %p133
        %s508 = sand.u32 %s52, 1
        %s509 = scalar_lea.sflag [#allocation16], %s508
        %s510 = sand.u32 %s151, 1
        %s511 = scalar_lea.vmem [#allocation15], %s510
        %p512 = pneg %p164
        %p513 = pneg %p161
        %s514 = sand.u32 %s52, 1
        %s515 = scalar_lea.sflag [#allocation16], %s514
        %s516 = sand.u32 %s179, 1
        %s517 = scalar_lea.vmem [#allocation17], %s516
        %p518 = pneg %p192
        %p519 = pneg %p189
        %s520 = sand.u32 %s52, 1
        %s521 = scalar_lea.sflag [#allocation19], %s520
        %s522 = sand.u32 %s205, 1
        %s523 = smul.addr %s522, 16
        %s524 = scalar_lea.vmem [#allocation18], %s523
        %p525 = pneg %p218
        %p526 = pneg %p215
        %p527 = pneg %p239
        %p528 = pneg %p236
        %p529 = pneg %p260
        %p530 = pneg %p257
        %p531 = pneg %p281
        %p532 = pneg %p278
        %s534 = sld [smem:[#allocation5 + %s57]]
        %s535 = sld [smem:[#allocation6 + %s57]]
        %s536 = sld [smem:[#allocation7 + %s57]]
        %p537 = scmp.eq.s32.totalorder %s536, 1
        %s538 = sld [smem:[#allocation8 + %s57]]
        %p539 = scmp.eq.s32.totalorder %s538, 1
        %p540 = scmp.lt.s32.totalorder %s56, 0
        %s541 = ssub.s32 0, %s56
        %s542 = scalar_select %p540, %s541, %s56
        %s543 = sand.u32 %s542, 1
        %s544 = ssub.s32 0, %s543
        %s545 = scalar_select %p540, %s544, %s543
        %p546 = scmp.ne.s32.totalorder %s545, 0
        %p547 = scmp.lt.s32.totalorder %s545, 0
        %p548 = pnand %p547, %p546
        %p549 = pneg %p548
        %s550 = sadd.s32 %s545, 2
        %s551 = scalar_select %p549, %s550, %s545
        %s552 = smul.u32 %s551, 4
        %s553 = sadd.s32 %s56, 1
        %p554 = scmp.lt.s32.totalorder %s553, 0
        %s555 = ssub.s32 0, %s553
        %s556 = scalar_select %p554, %s555, %s553
        %s557 = sand.u32 %s556, 1
        %s558 = ssub.s32 0, %s557
        %s559 = scalar_select %p554, %s558, %s557
        %p560 = scmp.ne.s32.totalorder %s559, 0
        %p561 = scmp.lt.s32.totalorder %s559, 0
        %p562 = pnand %p561, %p560
        %p563 = pneg %p562
        %s564 = sadd.s32 %s559, 2
        %s565 = scalar_select %p563, %s564, %s559
        %s566 = smul.u32 %s565, 4
        %p567 = scmp.eq.s32.totalorder %s56, 0
        %p568 = scmp.eq.s32.totalorder %s57, 0
        %p569 = pnand %p567, %p568
        %p570 = pneg %p569
        // Predicated region
        $region81: #{kg_hetero_gnn_forward.1} parent=51 // pred_check
          _
        $region82: #{kg_hetero_gnn_forward.1} parent=51 // pred_check_branch
          %572 = sbr.rel (%p569) target = $region84
        $region83: #{kg_hetero_gnn_forward.1} parent=51 // pred_region
          %v573 = vld [vmem:[#allocation9] sm:$0xf]
          %v574 = vld [vmem:[#allocation9 + $0x4] sm:$0xf]
          %v577 = vunpack.c.l.b16 %v573
          %v578 = vunpack.c.l.b16 %v574
          %v579 = vpack.c.b16 %v578, %v577
          %581 = vst [vmem:[#allocation2] sm:$0xff] %v579
          %s582 = scalar_lea.vmem [#allocation9], 8
          %v583 = vld [vmem:[%s582] sm:$0xf]
          %v584 = vld [vmem:[%s582 + $0x4] sm:$0xf]
          %v587 = vunpack.c.l.b16 %v583
          %v588 = vunpack.c.l.b16 %v584
          %v589 = vpack.c.b16 %v588, %v587
          %s591 = scalar_lea.vmem [#allocation2], 8
          %592 = vst [vmem:[%s591] sm:$0xff] %v589
          %s593 = scalar_lea.vmem [#allocation9], 16
          %v594 = vld [vmem:[%s593] sm:$0xf]
          %v595 = vld [vmem:[%s593 + $0x4] sm:$0xf]
          %v598 = vunpack.c.l.b16 %v594
          %v599 = vunpack.c.l.b16 %v595
          %v600 = vpack.c.b16 %v599, %v598
          %s602 = scalar_lea.vmem [#allocation2], 16
          %603 = vst [vmem:[%s602] sm:$0xff] %v600
          %s604 = scalar_lea.vmem [#allocation9], 24
          %v605 = vld [vmem:[%s604] sm:$0xf]
          %v606 = vld [vmem:[%s604 + $0x4] sm:$0xf]
          %v609 = vunpack.c.l.b16 %v605
          %v610 = vunpack.c.l.b16 %v606
          %v611 = vpack.c.b16 %v610, %v609
          %s613 = scalar_lea.vmem [#allocation2], 24
          %614 = vst [vmem:[%s613] sm:$0xff] %v611
        $region84: #{kg_hetero_gnn_forward.1} parent=51 // pred_fallthru
          _
        %s615 = sadd.s32 %s552, %s534
        %s616 = smul.addr %s615, 8
        %s617 = scalar_lea.vmem [#allocation2], %s616
        %v618 = vld [vmem:[%s617] sm:$0xff]
        %s619 = sadd.s32 %s552, %s535
        %s620 = smul.addr %s619, 8
        %s621 = scalar_lea.vmem [#allocation2], %s620
        %v622 = vld [vmem:[%s621] sm:$0xff]
        %v623 = vld [vmem:[%s449] sm:$0xf]
        %v624 = vld [vmem:[%s449 + $0x4] sm:$0xf]
        %v625 = vld [vmem:[%s449 + $0x8] sm:$0xf]
        %v626 = vld [vmem:[%s449 + $0xc] sm:$0xf]
        %v627 = vld [vmem:[%s449 + $0x10] sm:$0xf]
        %v628 = vld [vmem:[%s449 + $0x14] sm:$0xf]
        %v629 = vld [vmem:[%s449 + $0x18] sm:$0xf]
        %v630 = vld [vmem:[%s449 + $0x1c] sm:$0xf]
        %v631 = vld [vmem:[%s449 + $0x20] sm:$0xf]
        %v632 = vld [vmem:[%s449 + $0x24] sm:$0xf]
        %v633 = vld [vmem:[%s449 + $0x28] sm:$0xf]
        %v634 = vld [vmem:[%s449 + $0x2c] sm:$0xf]
        %v635 = vld [vmem:[%s449 + $0x30] sm:$0xf]
        %v636 = vld [vmem:[%s449 + $0x34] sm:$0xf]
        %v637 = vld [vmem:[%s449 + $0x38] sm:$0xf]
        %v638 = vld [vmem:[%s449 + $0x3c] sm:$0xf]
        %v655 = vunpack.c.l.b16 %v623
        %v656 = vunpack.c.l.b16 %v624
        %v657 = vunpack.c.l.b16 %v625
        %v658 = vunpack.c.l.b16 %v626
        %v659 = vunpack.c.l.b16 %v627
        %v660 = vunpack.c.l.b16 %v628
        %v661 = vunpack.c.l.b16 %v629
        %v662 = vunpack.c.l.b16 %v630
        %v663 = vunpack.c.l.b16 %v631
        %v664 = vunpack.c.l.b16 %v632
        %v665 = vunpack.c.l.b16 %v633
        %v666 = vunpack.c.l.b16 %v634
        %v667 = vunpack.c.l.b16 %v635
        %v668 = vunpack.c.l.b16 %v636
        %v669 = vunpack.c.l.b16 %v637
        %v670 = vunpack.c.l.b16 %v638
        %v671 = vpack.c.b16 %v656, %v655
        %v672 = vpack.c.b16 %v658, %v657
        %v673 = vpack.c.b16 %v660, %v659
        %v674 = vpack.c.b16 %v662, %v661
        %v675 = vpack.c.b16 %v664, %v663
        %v676 = vpack.c.b16 %v666, %v665
        %v677 = vpack.c.b16 %v668, %v667
        %v678 = vpack.c.b16 %v670, %v669
        %687 = vmatprep.subr.bf16.mxu0 0
        %688 = vmatpush1.bf16.msra.mxu0 %v671
        %689 = vmatprep.subr.bf16.mxu0 0
        %690 = vmatpush1.bf16.msra.mxu0 %v672
        %691 = vmatprep.subr.bf16.mxu0 0
        %692 = vmatpush1.bf16.msra.mxu0 %v673
        %693 = vmatprep.subr.bf16.mxu0 0
        %694 = vmatpush1.bf16.msra.mxu0 %v674
        %695 = vmatprep.subr.bf16.mxu0 0
        %696 = vmatpush1.bf16.msra.mxu0 %v675
        %697 = vmatprep.subr.bf16.mxu0 0
        %698 = vmatpush1.bf16.msra.mxu0 %v676
        %699 = vmatprep.subr.bf16.mxu0 0
        %700 = vmatpush1.bf16.msra.mxu0 %v677
        %701 = vmatprep.subr.bf16.mxu0 0
        %702 = vmatpush1.bf16.msra.mxu0 %v678
        %703 = vmatprep.subr.bf16.mxu0 0
        %704 = vmatpush1.bf16.msra.mxu0 0
        %705 = vmatprep.subr.bf16.mxu0 0
        %706 = vmatpush1.bf16.msra.mxu0 0
        %707 = vmatprep.subr.bf16.mxu0 0
        %708 = vmatpush1.bf16.msra.mxu0 0
        %709 = vmatprep.subr.bf16.mxu0 0
        %710 = vmatpush1.bf16.msra.mxu0 0
        %711 = vmatprep.subr.bf16.mxu0 0
        %712 = vmatpush1.bf16.msra.mxu0 0
        %713 = vmatprep.subr.bf16.mxu0 0
        %714 = vmatpush1.bf16.msra.mxu0 0
        %715 = vmatprep.subr.bf16.mxu0 0
        %716 = vmatpush1.bf16.msra.mxu0 0
        %717 = vmatprep.subr.bf16.mxu0 0
        %718 = vmatpush1.bf16.msra.mxu0 0
        %719 = vmatprep.mubr.bf16.mxu0 0
        %720 = vmatmul.mubr.bf16.gmra.mrb[0].mxu0 %v618
        %v721 = vpop.f32.mrb[0].mxu0
        %v722 = vadd.f32 0.0, %v721
        %v723 = vpop.f32.mrb[0].mxu0
        %v724 = vpop.f32.mrb[0].mxu0
        %v725 = vadd.f32 0.0, %v724
        %v726 = vpop.f32.mrb[0].mxu0
        %727 = vdwg.mxu0
        %v728 = vld [vmem:[%s458] sm:$0xf]
        %v729 = vld [vmem:[%s458 + $0x4] sm:$0xf]
        %v730 = vld [vmem:[%s458 + $0x8] sm:$0xf]
        %v731 = vld [vmem:[%s458 + $0xc] sm:$0xf]
        %v732 = vld [vmem:[%s458 + $0x10] sm:$0xf]
        %v733 = vld [vmem:[%s458 + $0x14] sm:$0xf]
        %v734 = vld [vmem:[%s458 + $0x18] sm:$0xf]
        %v735 = vld [vmem:[%s458 + $0x1c] sm:$0xf]
        %v736 = vld [vmem:[%s458 + $0x20] sm:$0xf]
        %v737 = vld [vmem:[%s458 + $0x24] sm:$0xf]
        %v738 = vld [vmem:[%s458 + $0x28] sm:$0xf]
        %v739 = vld [vmem:[%s458 + $0x2c] sm:$0xf]
        %v740 = vld [vmem:[%s458 + $0x30] sm:$0xf]
        %v741 = vld [vmem:[%s458 + $0x34] sm:$0xf]
        %v742 = vld [vmem:[%s458 + $0x38] sm:$0xf]
        %v743 = vld [vmem:[%s458 + $0x3c] sm:$0xf]
        %v760 = vunpack.c.l.b16 %v728
        %v761 = vunpack.c.l.b16 %v729
        %v762 = vunpack.c.l.b16 %v730
        %v763 = vunpack.c.l.b16 %v731
        %v764 = vunpack.c.l.b16 %v732
        %v765 = vunpack.c.l.b16 %v733
        %v766 = vunpack.c.l.b16 %v734
        %v767 = vunpack.c.l.b16 %v735
        %v768 = vunpack.c.l.b16 %v736
        %v769 = vunpack.c.l.b16 %v737
        %v770 = vunpack.c.l.b16 %v738
        %v771 = vunpack.c.l.b16 %v739
        %v772 = vunpack.c.l.b16 %v740
        %v773 = vunpack.c.l.b16 %v741
        %v774 = vunpack.c.l.b16 %v742
        %v775 = vunpack.c.l.b16 %v743
        %v776 = vpack.c.b16 %v761, %v760
        %v777 = vpack.c.b16 %v763, %v762
        %v778 = vpack.c.b16 %v765, %v764
        %v779 = vpack.c.b16 %v767, %v766
        %v780 = vpack.c.b16 %v769, %v768
        %v781 = vpack.c.b16 %v771, %v770
        %v782 = vpack.c.b16 %v773, %v772
        %v783 = vpack.c.b16 %v775, %v774
        %792 = vmatprep.subr.bf16.mxu0 0
        %793 = vmatpush1.bf16.msra.mxu0 %v776
        %794 = vmatprep.subr.bf16.mxu0 0
        %795 = vmatpush1.bf16.msra.mxu0 %v777
        %796 = vmatprep.subr.bf16.mxu0 0
        %797 = vmatpush1.bf16.msra.mxu0 %v778
        %798 = vmatprep.subr.bf16.mxu0 0
        %799 = vmatpush1.bf16.msra.mxu0 %v779
        %800 = vmatprep.subr.bf16.mxu0 0
        %801 = vmatpush1.bf16.msra.mxu0 %v780
        %802 = vmatprep.subr.bf16.mxu0 0
        %803 = vmatpush1.bf16.msra.mxu0 %v781
        %804 = vmatprep.subr.bf16.mxu0 0
        %805 = vmatpush1.bf16.msra.mxu0 %v782
        %806 = vmatprep.subr.bf16.mxu0 0
        %807 = vmatpush1.bf16.msra.mxu0 %v783
        %808 = vmatprep.subr.bf16.mxu0 0
        %809 = vmatpush1.bf16.msra.mxu0 0
        %810 = vmatprep.subr.bf16.mxu0 0
        %811 = vmatpush1.bf16.msra.mxu0 0
        %812 = vmatprep.subr.bf16.mxu0 0
        %813 = vmatpush1.bf16.msra.mxu0 0
        %814 = vmatprep.subr.bf16.mxu0 0
        %815 = vmatpush1.bf16.msra.mxu0 0
        %816 = vmatprep.subr.bf16.mxu0 0
        %817 = vmatpush1.bf16.msra.mxu0 0
        %818 = vmatprep.subr.bf16.mxu0 0
        %819 = vmatpush1.bf16.msra.mxu0 0
        %820 = vmatprep.subr.bf16.mxu0 0
        %821 = vmatpush1.bf16.msra.mxu0 0
        %822 = vmatprep.subr.bf16.mxu0 0
        %823 = vmatpush1.bf16.msra.mxu0 0
        %824 = vmatprep.mubr.bf16.mxu0 0
        %825 = vmatmul.mubr.bf16.gmra.mrb[0].mxu0 %v622
        %v826 = vpop.f32.mrb[0].mxu0
        %v827 = vadd.f32 0.0, %v826
        %v828 = vpop.f32.mrb[0].mxu0
        %v829 = vpop.f32.mrb[0].mxu0
        %v830 = vadd.f32 0.0, %v829
        %v831 = vpop.f32.mrb[0].mxu0
        %832 = vdwg.mxu0
        %v833 = vpack.c.bf16 %v725, %v722
        %v834 = vld [vmem:[%s466] sm:$0x1]
        %v835 = vld [vmem:[%s483] sm:$0xff]
        %v836 = vld [vmem:[%s483 + $0x8] sm:$0xff]
        %v837 = vld [vmem:[%s474] sm:$0x1]
        %vm838 = vcmp.gt.f32.partialorder %v835, 0.5
        %v840 = vcombine.high %v827, %v827
        %v842 = vunpack.c.l.s4 1966171168
        %v843 = vunpack.c.0.s8 %v842
        %v844 = vlaneseq
        %v845 = vshrl.u32 %v844, 7
        %v846 = vsub.s32 %v843, %v845
        %v847 = vrot.slane %v827, %v846
        %v849 = vunpack.c.l.s4 1966171168
        %v850 = vunpack.c.0.s8 %v849
        %v851 = vlaneseq
        %v852 = vshrl.u32 %v851, 7
        %v853 = vsub.s32 %v850, %v852
        %v854 = vrot.slane %v840, %v853
        %v855 = vcombine.high %v847, %v847
        %v856 = vcombine.high %v854, %v854
        %v858 = vunpack.c.l.s4 1966171168
        %v859 = vunpack.c.0.s8 %v858
        %v860 = vlaneseq
        %v861 = vshrl.u32 %v860, 7
        %v862 = vsub.s32 %v859, %v861
        %v863 = vrot.slane %v847, %v862
        %v865 = vunpack.c.l.s4 1966171168
        %v866 = vunpack.c.0.s8 %v865
        %v867 = vlaneseq
        %v868 = vshrl.u32 %v867, 7
        %v869 = vsub.s32 %v866, %v868
        %v870 = vrot.slane %v854, %v869
        %v872 = vunpack.c.l.s4 1966171168
        %v873 = vunpack.c.0.s8 %v872
        %v874 = vlaneseq
        %v875 = vshrl.u32 %v874, 7
        %v876 = vsub.s32 %v873, %v875
        %v877 = vrot.slane %v855, %v876
        %v879 = vunpack.c.l.s4 1966171168
        %v880 = vunpack.c.0.s8 %v879
        %v881 = vlaneseq
        %v882 = vshrl.u32 %v881, 7
        %v883 = vsub.s32 %v880, %v882
        %v884 = vrot.slane %v856, %v883
        %v885 = vcombine.high %v863, %v863
        %v886 = vcombine.high %v870, %v870
        %v887 = vcombine.high %v877, %v877
        %v888 = vcombine.high %v884, %v884
        %v889 = vlaneseq
        %v890 = vshrl.u32 %v889, 7
        %v891 = vsub.s32 0, %v890
        %v892 = vrot.slane %v863, %v891
        %v893 = vlaneseq
        %v894 = vshrl.u32 %v893, 7
        %v895 = vsub.s32 0, %v894
        %v896 = vrot.slane %v877, %v895
        %v897 = vlaneseq
        %v898 = vshrl.u32 %v897, 7
        %v899 = vsub.s32 0, %v898
        %v900 = vrot.slane %v885, %v899
        %v901 = vlaneseq
        %v902 = vshrl.u32 %v901, 7
        %v903 = vsub.s32 0, %v902
        %v904 = vrot.slane %v887, %v903
        %v905 = vlaneseq
        %v906 = vshrl.u32 %v905, 7
        %v907 = vsub.s32 0, %v906
        %v908 = vrot.slane %v870, %v907
        %v909 = vlaneseq
        %v910 = vshrl.u32 %v909, 7
        %v911 = vsub.s32 0, %v910
        %v912 = vrot.slane %v884, %v911
        %v913 = vlaneseq
        %v914 = vshrl.u32 %v913, 7
        %v915 = vsub.s32 0, %v914
        %v916 = vrot.slane %v886, %v915
        %v917 = vlaneseq
        %v918 = vshrl.u32 %v917, 7
        %v919 = vsub.s32 0, %v918
        %v920 = vrot.slane %v888, %v919
        %v929 = vadd.f32 %v892, %v722
        %v930 = vadd.f32 %v892, %v725
        %v931 = vadd.f32 %v896, %v722
        %v932 = vadd.f32 %v896, %v725
        %v933 = vadd.f32 %v900, %v722
        %v934 = vadd.f32 %v900, %v725
        %v935 = vadd.f32 %v904, %v722
        %v936 = vadd.f32 %v904, %v725
        %v937 = vadd.f32 %v908, %v722
        %v938 = vadd.f32 %v908, %v725
        %v939 = vadd.f32 %v912, %v722
        %v940 = vadd.f32 %v912, %v725
        %v941 = vadd.f32 %v916, %v722
        %v942 = vadd.f32 %v916, %v725
        %v943 = vadd.f32 %v920, %v722
        %v944 = vadd.f32 %v920, %v725
        %vm945 = vcmp.gt.f32.partialorder %v929, 0.0
        %vm946 = vcmp.gt.f32.partialorder %v930, 0.0
        %vm947 = vcmp.gt.f32.partialorder %v931, 0.0
        %vm948 = vcmp.gt.f32.partialorder %v932, 0.0
        %vm949 = vcmp.gt.f32.partialorder %v933, 0.0
        %vm950 = vcmp.gt.f32.partialorder %v934, 0.0
        %vm951 = vcmp.gt.f32.partialorder %v935, 0.0
        %vm952 = vcmp.gt.f32.partialorder %v936, 0.0
        %vm953 = vcmp.gt.f32.partialorder %v937, 0.0
        %vm954 = vcmp.gt.f32.partialorder %v938, 0.0
        %vm955 = vcmp.gt.f32.partialorder %v939, 0.0
        %vm956 = vcmp.gt.f32.partialorder %v940, 0.0
        %vm957 = vcmp.gt.f32.partialorder %v941, 0.0
        %vm958 = vcmp.gt.f32.partialorder %v942, 0.0
        %vm959 = vcmp.gt.f32.partialorder %v943, 0.0
        %vm960 = vcmp.gt.f32.partialorder %v944, 0.0
        %v961 = vmul.f32 %v929, 0.2
        %v962 = vmul.f32 %v930, 0.2
        %v963 = vmul.f32 %v931, 0.2
        %v964 = vmul.f32 %v932, 0.2
        %v965 = vmul.f32 %v933, 0.2
        %v966 = vmul.f32 %v934, 0.2
        %v967 = vmul.f32 %v935, 0.2
        %v968 = vmul.f32 %v936, 0.2
        %v969 = vmul.f32 %v937, 0.2
        %v970 = vmul.f32 %v938, 0.2
        %v971 = vmul.f32 %v939, 0.2
        %v972 = vmul.f32 %v940, 0.2
        %v973 = vmul.f32 %v941, 0.2
        %v974 = vmul.f32 %v942, 0.2
        %v975 = vmul.f32 %v943, 0.2
        %v976 = vmul.f32 %v944, 0.2
        %v977 = vsel %vm945, %v929, %v961
        %v978 = vsel %vm946, %v930, %v962
        %v979 = vsel %vm947, %v931, %v963
        %v980 = vsel %vm948, %v932, %v964
        %v981 = vsel %vm949, %v933, %v965
        %v982 = vsel %vm950, %v934, %v966
        %v983 = vsel %vm951, %v935, %v967
        %v984 = vsel %vm952, %v936, %v968
        %v985 = vsel %vm953, %v937, %v969
        %v986 = vsel %vm954, %v938, %v970
        %v987 = vsel %vm955, %v939, %v971
        %v988 = vsel %vm956, %v940, %v972
        %v989 = vsel %vm957, %v941, %v973
        %v990 = vsel %vm958, %v942, %v974
        %v991 = vsel %vm959, %v943, %v975
        %v992 = vsel %vm960, %v944, %v976
        %v994 = vlaneseq
        %v995 = vshrl.u32 %v994, 7
        %v996 = vsub.s32 0, %v995
        %v997 = vrot.slane %v834, %v996
        %v999 = vmul.f32 %v977, %v997
        %v1000 = vmul.f32 %v978, %v997
        %v1001 = vmul.f32 %v979, %v997
        %v1002 = vmul.f32 %v980, %v997
        %v1003 = vmul.f32 %v981, %v997
        %v1004 = vmul.f32 %v982, %v997
        %v1005 = vmul.f32 %v983, %v997
        %v1006 = vmul.f32 %v984, %v997
        %v1007 = vmul.f32 %v985, %v997
        %v1008 = vmul.f32 %v986, %v997
        %v1009 = vmul.f32 %v987, %v997
        %v1010 = vmul.f32 %v988, %v997
        %v1011 = vmul.f32 %v989, %v997
        %v1012 = vmul.f32 %v990, %v997
        %v1013 = vmul.f32 %v991, %v997
        %v1014 = vmul.f32 %v992, %v997
        %1015 = vadd.xlane.f32.xlu0 %v999
        %v1016 = vpop.xlane.xlu0 %1015
        %1017 = vadd.xlane.f32.xlu0 %v1000
        %v1018 = vpop.xlane.xlu0 %1017
        %1019 = vadd.xlane.f32.xlu0 %v1001
        %v1020 = vpop.xlane.xlu0 %1019
        %1021 = vadd.xlane.f32.xlu0 %v1002
        %v1022 = vpop.xlane.xlu0 %1021
        %1023 = vadd.xlane.f32.xlu0 %v1003
        %v1024 = vpop.xlane.xlu0 %1023
        %1025 = vadd.xlane.f32.xlu0 %v1004
        %v1026 = vpop.xlane.xlu0 %1025
        %1027 = vadd.xlane.f32.xlu0 %v1005
        %v1028 = vpop.xlane.xlu0 %1027
        %1029 = vadd.xlane.f32.xlu0 %v1006
        %v1030 = vpop.xlane.xlu0 %1029
        %1031 = vadd.xlane.f32.xlu0 %v1007
        %v1032 = vpop.xlane.xlu0 %1031
        %1033 = vadd.xlane.f32.xlu0 %v1008
        %v1034 = vpop.xlane.xlu0 %1033
        %1035 = vadd.xlane.f32.xlu0 %v1009
        %v1036 = vpop.xlane.xlu0 %1035
        %1037 = vadd.xlane.f32.xlu0 %v1010
        %v1038 = vpop.xlane.xlu0 %1037
        %1039 = vadd.xlane.f32.xlu0 %v1011
        %v1040 = vpop.xlane.xlu0 %1039
        %1041 = vadd.xlane.f32.xlu0 %v1012
        %v1042 = vpop.xlane.xlu0 %1041
        %1043 = vadd.xlane.f32.xlu0 %v1013
        %v1044 = vpop.xlane.xlu0 %1043
        %1045 = vadd.xlane.f32.xlu0 %v1014
        %v1046 = vpop.xlane.xlu0 %1045
        %v1063 = vlaneseq
        %v1064 = vand.u32 %v1063, 127
        %v1065 = vlaneseq
        %v1066 = vshrl.u32 %v1065, 7
        %v1067 = vsub.s32 %v1064, %v1066
        %v1068 = vrot.slane %v1016, %v1067
        %v1069 = vadd.s32 %v1064, 4294967288
        %v1070 = vlaneseq
        %v1071 = vshrl.u32 %v1070, 7
        %v1072 = vsub.s32 %v1069, %v1071
        %v1073 = vrot.slane %v1018, %v1072
        %vm1074 = vcmask 130112
        %v1075 = vsel %vm1074, %v1073, %v1068
        %v1076 = vlaneseq
        %v1077 = vshrl.u32 %v1076, 7
        %v1078 = vsub.s32 %v1064, %v1077
        %v1079 = vrot.slane %v1020, %v1078
        %v1080 = vlaneseq
        %v1081 = vshrl.u32 %v1080, 7
        %v1082 = vsub.s32 %v1069, %v1081
        %v1083 = vrot.slane %v1022, %v1082
        %v1084 = vsel %vm1074, %v1083, %v1079
        %v1085 = vlaneseq
        %v1086 = vshrl.u32 %v1085, 7
        %v1087 = vsub.s32 %v1064, %v1086
        %v1088 = vrot.slane %v1024, %v1087
        %v1089 = vlaneseq
        %v1090 = vshrl.u32 %v1089, 7
        %v1091 = vsub.s32 %v1069, %v1090
        %v1092 = vrot.slane %v1026, %v1091
        %v1093 = vsel %vm1074, %v1092, %v1088
        %v1094 = vlaneseq
        %v1095 = vshrl.u32 %v1094, 7
        %v1096 = vsub.s32 %v1064, %v1095
        %v1097 = vrot.slane %v1028, %v1096
        %v1098 = vlaneseq
        %v1099 = vshrl.u32 %v1098, 7
        %v1100 = vsub.s32 %v1069, %v1099
        %v1101 = vrot.slane %v1030, %v1100
        %v1102 = vsel %vm1074, %v1101, %v1097
        %v1103 = vlaneseq
        %v1104 = vshrl.u32 %v1103, 7
        %v1105 = vsub.s32 %v1064, %v1104
        %v1106 = vrot.slane %v1032, %v1105
        %v1107 = vlaneseq
        %v1108 = vshrl.u32 %v1107, 7
        %v1109 = vsub.s32 %v1069, %v1108
        %v1110 = vrot.slane %v1034, %v1109
        %v1111 = vsel %vm1074, %v1110, %v1106
        %v1112 = vlaneseq
        %v1113 = vshrl.u32 %v1112, 7
        %v1114 = vsub.s32 %v1064, %v1113
        %v1115 = vrot.slane %v1036, %v1114
        %v1116 = vlaneseq
        %v1117 = vshrl.u32 %v1116, 7
        %v1118 = vsub.s32 %v1069, %v1117
        %v1119 = vrot.slane %v1038, %v1118
        %v1120 = vsel %vm1074, %v1119, %v1115
        %v1121 = vlaneseq
        %v1122 = vshrl.u32 %v1121, 7
        %v1123 = vsub.s32 %v1064, %v1122
        %v1124 = vrot.slane %v1040, %v1123
        %v1125 = vlaneseq
        %v1126 = vshrl.u32 %v1125, 7
        %v1127 = vsub.s32 %v1069, %v1126
        %v1128 = vrot.slane %v1042, %v1127
        %v1129 = vsel %vm1074, %v1128, %v1124
        %v1130 = vlaneseq
        %v1131 = vshrl.u32 %v1130, 7
        %v1132 = vsub.s32 %v1064, %v1131
        %v1133 = vrot.slane %v1044, %v1132
        %v1134 = vlaneseq
        %v1135 = vshrl.u32 %v1134, 7
        %v1136 = vsub.s32 %v1069, %v1135
        %v1137 = vrot.slane %v1046, %v1136
        %v1138 = vsel %vm1074, %v1137, %v1133
        %vm1139 = vcmask 1041409
        %v1140 = vsel %vm1139, %v1084, %v1075
        %vm1141 = vcmask 1042434
        %v1142 = vsel %vm1141, %v1093, %v1140
        %vm1143 = vcmask 1043459
        %v1144 = vsel %vm1143, %v1102, %v1142
        %vm1145 = vcmask 1044484
        %v1146 = vsel %vm1145, %v1111, %v1144
        %vm1147 = vcmask 1045509
        %v1148 = vsel %vm1147, %v1120, %v1146
        %vm1149 = vcmask 1046534
        %v1150 = vsel %vm1149, %v1129, %v1148
        %vm1151 = vcmask 1047559
        %v1152 = vsel %vm1151, %v1138, %v1150
        %v1154 = vsel %vm838, %v1152, -1e+30
        %vm1155 = vcmask 130048
        %v1156 = vsel %vm1155, %v1154, -inf
        %1157 = vmax.xlane.f32.xlu0 %v1156
        %v1158 = vpop.xlane.xlu0 %1157
        %v1159 = vsub.f32 %v1154, %v1158
        %v1160 = vmul.f32 %v1159, 1.442695
        %v1161 = vpow.pop %v1160
        %v1162 = vsel %vm838, %v1161, 0.0
        %v1163 = vsel %vm1155, %v1162, 0.0
        %1164 = vadd.xlane.f32.xlu0 %v1163
        %v1165 = vpop.xlane.xlu0 %1164
        %v1166 = vpack.c.bf16 %v1162, %v1162
        %v1168 = vsel %vm1155, %v1166, 0
        %1170 = vmatprep.subr.bf16.mxu0 0
        %1171 = vmatpush1.bf16.msra.mxu0 %v833
        %1172 = vmatprep.subr.bf16.mxu0 0
        %1173 = vmatpush1.bf16.msra.mxu0 0
        %1174 = vmatprep.subr.bf16.mxu0 0
        %1175 = vmatpush1.bf16.msra.mxu0 0
        %1176 = vmatprep.subr.bf16.mxu0 0
        %1177 = vmatpush1.bf16.msra.mxu0 0
        %1178 = vmatprep.subr.bf16.mxu0 0
        %1179 = vmatpush1.bf16.msra.mxu0 0
        %1180 = vmatprep.subr.bf16.mxu0 0
        %1181 = vmatpush1.bf16.msra.mxu0 0
        %1182 = vmatprep.subr.bf16.mxu0 0
        %1183 = vmatpush1.bf16.msra.mxu0 0
        %1184 = vmatprep.subr.bf16.mxu0 0
        %1185 = vmatpush1.bf16.msra.mxu0 0
        %1186 = vmatprep.subr.bf16.mxu0 0
        %1187 = vmatpush1.bf16.msra.mxu0 0
        %1188 = vmatprep.subr.bf16.mxu0 0
        %1189 = vmatpush1.bf16.msra.mxu0 0
        %1190 = vmatprep.subr.bf16.mxu0 0
        %1191 = vmatpush1.bf16.msra.mxu0 0
        %1192 = vmatprep.subr.bf16.mxu0 0
        %1193 = vmatpush1.bf16.msra.mxu0 0
        %1194 = vmatprep.subr.bf16.mxu0 0
        %1195 = vmatpush1.bf16.msra.mxu0 0
        %1196 = vmatprep.subr.bf16.mxu0 0
        %1197 = vmatpush1.bf16.msra.mxu0 0
        %1198 = vmatprep.subr.bf16.mxu0 0
        %1199 = vmatpush1.bf16.msra.mxu0 0
        %1200 = vmatprep.subr.bf16.mxu0 0
        %1201 = vmatpush1.bf16.msra.mxu0 0
        %1202 = vmatprep.mubr.bf16.mxu0 0
        %1203 = vmatmul.mubr.bf16.gmra.mrb[0].mxu0 %v1168
        %v1204 = vpop.f32.mrb[0].mxu0
        %v1205 = vadd.f32 0.0, %v1204
        %v1206 = vpop.f32.mrb[0].mxu0
        %v1207 = vpop.f32.mrb[0].mxu0
        %v1208 = vpop.f32.mrb[0].mxu0
        %1209 = vdwg.mxu0
        %v1210 = vmax.f32 %v1165, 1e-30
        %v1211 = vrcp.pop %v1210
        %v1212 = vmul.f32 %v1205, %v1211
        %v1214 = vlaneseq
        %v1215 = vshrl.u32 %v1214, 7
        %v1216 = vsub.s32 0, %v1215
        %v1217 = vrot.slane %v837, %v1216
        %v1219 = vadd.f32 %v1212, %v1217
        %vm1220 = vcmp.gt.f32.partialorder %v836, 0.5
        %v1222 = vcombine.high %v830, %v830
        %v1224 = vunpack.c.l.s4 1966171168
        %v1225 = vunpack.c.0.s8 %v1224
        %v1226 = vlaneseq
        %v1227 = vshrl.u32 %v1226, 7
        %v1228 = vsub.s32 %v1225, %v1227
        %v1229 = vrot.slane %v830, %v1228
        %v1231 = vunpack.c.l.s4 1966171168
        %v1232 = vunpack.c.0.s8 %v1231
        %v1233 = vlaneseq
        %v1234 = vshrl.u32 %v1233, 7
        %v1235 = vsub.s32 %v1232, %v1234
        %v1236 = vrot.slane %v1222, %v1235
        %v1237 = vcombine.high %v1229, %v1229
        %v1238 = vcombine.high %v1236, %v1236
        %v1240 = vunpack.c.l.s4 1966171168
        %v1241 = vunpack.c.0.s8 %v1240
        %v1242 = vlaneseq
        %v1243 = vshrl.u32 %v1242, 7
        %v1244 = vsub.s32 %v1241, %v1243
        %v1245 = vrot.slane %v1229, %v1244
        %v1247 = vunpack.c.l.s4 1966171168
        %v1248 = vunpack.c.0.s8 %v1247
        %v1249 = vlaneseq
        %v1250 = vshrl.u32 %v1249, 7
        %v1251 = vsub.s32 %v1248, %v1250
        %v1252 = vrot.slane %v1236, %v1251
        %v1254 = vunpack.c.l.s4 1966171168
        %v1255 = vunpack.c.0.s8 %v1254
        %v1256 = vlaneseq
        %v1257 = vshrl.u32 %v1256, 7
        %v1258 = vsub.s32 %v1255, %v1257
        %v1259 = vrot.slane %v1237, %v1258
        %v1261 = vunpack.c.l.s4 1966171168
        %v1262 = vunpack.c.0.s8 %v1261
        %v1263 = vlaneseq
        %v1264 = vshrl.u32 %v1263, 7
        %v1265 = vsub.s32 %v1262, %v1264
        %v1266 = vrot.slane %v1238, %v1265
        %v1267 = vcombine.high %v1245, %v1245
        %v1268 = vcombine.high %v1252, %v1252
        %v1269 = vcombine.high %v1259, %v1259
        %v1270 = vcombine.high %v1266, %v1266
        %v1271 = vlaneseq
        %v1272 = vshrl.u32 %v1271, 7
        %v1273 = vsub.s32 0, %v1272
        %v1274 = vrot.slane %v1245, %v1273
        %v1275 = vlaneseq
        %v1276 = vshrl.u32 %v1275, 7
        %v1277 = vsub.s32 0, %v1276
        %v1278 = vrot.slane %v1259, %v1277
        %v1279 = vlaneseq
        %v1280 = vshrl.u32 %v1279, 7
        %v1281 = vsub.s32 0, %v1280
        %v1282 = vrot.slane %v1267, %v1281
        %v1283 = vlaneseq
        %v1284 = vshrl.u32 %v1283, 7
        %v1285 = vsub.s32 0, %v1284
        %v1286 = vrot.slane %v1269, %v1285
        %v1287 = vlaneseq
        %v1288 = vshrl.u32 %v1287, 7
        %v1289 = vsub.s32 0, %v1288
        %v1290 = vrot.slane %v1252, %v1289
        %v1291 = vlaneseq
        %v1292 = vshrl.u32 %v1291, 7
        %v1293 = vsub.s32 0, %v1292
        %v1294 = vrot.slane %v1266, %v1293
        %v1295 = vlaneseq
        %v1296 = vshrl.u32 %v1295, 7
        %v1297 = vsub.s32 0, %v1296
        %v1298 = vrot.slane %v1268, %v1297
        %v1299 = vlaneseq
        %v1300 = vshrl.u32 %v1299, 7
        %v1301 = vsub.s32 0, %v1300
        %v1302 = vrot.slane %v1270, %v1301
        %v1311 = vadd.f32 %v1274, %v722
        %v1312 = vadd.f32 %v1274, %v725
        %v1313 = vadd.f32 %v1278, %v722
        %v1314 = vadd.f32 %v1278, %v725
        %v1315 = vadd.f32 %v1282, %v722
        %v1316 = vadd.f32 %v1282, %v725
        %v1317 = vadd.f32 %v1286, %v722
        %v1318 = vadd.f32 %v1286, %v725
        %v1319 = vadd.f32 %v1290, %v722
        %v1320 = vadd.f32 %v1290, %v725
        %v1321 = vadd.f32 %v1294, %v722
        %v1322 = vadd.f32 %v1294, %v725
        %v1323 = vadd.f32 %v1298, %v722
        %v1324 = vadd.f32 %v1298, %v725
        %v1325 = vadd.f32 %v1302, %v722
        %v1326 = vadd.f32 %v1302, %v725
        %vm1327 = vcmp.gt.f32.partialorder %v1311, 0.0
        %vm1328 = vcmp.gt.f32.partialorder %v1312, 0.0
        %vm1329 = vcmp.gt.f32.partialorder %v1313, 0.0
        %vm1330 = vcmp.gt.f32.partialorder %v1314, 0.0
        %vm1331 = vcmp.gt.f32.partialorder %v1315, 0.0
        %vm1332 = vcmp.gt.f32.partialorder %v1316, 0.0
        %vm1333 = vcmp.gt.f32.partialorder %v1317, 0.0
        %vm1334 = vcmp.gt.f32.partialorder %v1318, 0.0
        %vm1335 = vcmp.gt.f32.partialorder %v1319, 0.0
        %vm1336 = vcmp.gt.f32.partialorder %v1320, 0.0
        %vm1337 = vcmp.gt.f32.partialorder %v1321, 0.0
        %vm1338 = vcmp.gt.f32.partialorder %v1322, 0.0
        %vm1339 = vcmp.gt.f32.partialorder %v1323, 0.0
        %vm1340 = vcmp.gt.f32.partialorder %v1324, 0.0
        %vm1341 = vcmp.gt.f32.partialorder %v1325, 0.0
        %vm1342 = vcmp.gt.f32.partialorder %v1326, 0.0
        %v1343 = vmul.f32 %v1311, 0.2
        %v1344 = vmul.f32 %v1312, 0.2
        %v1345 = vmul.f32 %v1313, 0.2
        %v1346 = vmul.f32 %v1314, 0.2
        %v1347 = vmul.f32 %v1315, 0.2
        %v1348 = vmul.f32 %v1316, 0.2
        %v1349 = vmul.f32 %v1317, 0.2
        %v1350 = vmul.f32 %v1318, 0.2
        %v1351 = vmul.f32 %v1319, 0.2
        %v1352 = vmul.f32 %v1320, 0.2
        %v1353 = vmul.f32 %v1321, 0.2
        %v1354 = vmul.f32 %v1322, 0.2
        %v1355 = vmul.f32 %v1323, 0.2
        %v1356 = vmul.f32 %v1324, 0.2
        %v1357 = vmul.f32 %v1325, 0.2
        %v1358 = vmul.f32 %v1326, 0.2
        %v1359 = vsel %vm1327, %v1311, %v1343
        %v1360 = vsel %vm1328, %v1312, %v1344
        %v1361 = vsel %vm1329, %v1313, %v1345
        %v1362 = vsel %vm1330, %v1314, %v1346
        %v1363 = vsel %vm1331, %v1315, %v1347
        %v1364 = vsel %vm1332, %v1316, %v1348
        %v1365 = vsel %vm1333, %v1317, %v1349
        %v1366 = vsel %vm1334, %v1318, %v1350
        %v1367 = vsel %vm1335, %v1319, %v1351
        %v1368 = vsel %vm1336, %v1320, %v1352
        %v1369 = vsel %vm1337, %v1321, %v1353
        %v1370 = vsel %vm1338, %v1322, %v1354
        %v1371 = vsel %vm1339, %v1323, %v1355
        %v1372 = vsel %vm1340, %v1324, %v1356
        %v1373 = vsel %vm1341, %v1325, %v1357
        %v1374 = vsel %vm1342, %v1326, %v1358
        %v1375 = vmul.f32 %v1359, %v997
        %v1376 = vmul.f32 %v1360, %v997
        %v1377 = vmul.f32 %v1361, %v997
        %v1378 = vmul.f32 %v1362, %v997
        %v1379 = vmul.f32 %v1363, %v997
        %v1380 = vmul.f32 %v1364, %v997
        %v1381 = vmul.f32 %v1365, %v997
        %v1382 = vmul.f32 %v1366, %v997
        %v1383 = vmul.f32 %v1367, %v997
        %v1384 = vmul.f32 %v1368, %v997
        %v1385 = vmul.f32 %v1369, %v997
        %v1386 = vmul.f32 %v1370, %v997
        %v1387 = vmul.f32 %v1371, %v997
        %v1388 = vmul.f32 %v1372, %v997
        %v1389 = vmul.f32 %v1373, %v997
        %v1390 = vmul.f32 %v1374, %v997
        %1391 = vadd.xlane.f32.xlu0 %v1375
        %v1392 = vpop.xlane.xlu0 %1391
        %1393 = vadd.xlane.f32.xlu0 %v1376
        %v1394 = vpop.xlane.xlu0 %1393
        %1395 = vadd.xlane.f32.xlu0 %v1377
        %v1396 = vpop.xlane.xlu0 %1395
        %1397 = vadd.xlane.f32.xlu0 %v1378
        %v1398 = vpop.xlane.xlu0 %1397
        %1399 = vadd.xlane.f32.xlu0 %v1379
        %v1400 = vpop.xlane.xlu0 %1399
        %1401 = vadd.xlane.f32.xlu0 %v1380
        %v1402 = vpop.xlane.xlu0 %1401
        %1403 = vadd.xlane.f32.xlu0 %v1381
        %v1404 = vpop.xlane.xlu0 %1403
        %1405 = vadd.xlane.f32.xlu0 %v1382
        %v1406 = vpop.xlane.xlu0 %1405
        %1407 = vadd.xlane.f32.xlu0 %v1383
        %v1408 = vpop.xlane.xlu0 %1407
        %1409 = vadd.xlane.f32.xlu0 %v1384
        %v1410 = vpop.xlane.xlu0 %1409
        %1411 = vadd.xlane.f32.xlu0 %v1385
        %v1412 = vpop.xlane.xlu0 %1411
        %1413 = vadd.xlane.f32.xlu0 %v1386
        %v1414 = vpop.xlane.xlu0 %1413
        %1415 = vadd.xlane.f32.xlu0 %v1387
        %v1416 = vpop.xlane.xlu0 %1415
        %1417 = vadd.xlane.f32.xlu0 %v1388
        %v1418 = vpop.xlane.xlu0 %1417
        %1419 = vadd.xlane.f32.xlu0 %v1389
        %v1420 = vpop.xlane.xlu0 %1419
        %1421 = vadd.xlane.f32.xlu0 %v1390
        %v1422 = vpop.xlane.xlu0 %1421
        %v1439 = vlaneseq
        %v1440 = vshrl.u32 %v1439, 7
        %v1441 = vsub.s32 %v1064, %v1440
        %v1442 = vrot.slane %v1392, %v1441
        %v1443 = vlaneseq
        %v1444 = vshrl.u32 %v1443, 7
        %v1445 = vsub.s32 %v1069, %v1444
        %v1446 = vrot.slane %v1394, %v1445
        %v1447 = vsel %vm1074, %v1446, %v1442
        %v1448 = vlaneseq
        %v1449 = vshrl.u32 %v1448, 7
        %v1450 = vsub.s32 %v1064, %v1449
        %v1451 = vrot.slane %v1396, %v1450
        %v1452 = vlaneseq
        %v1453 = vshrl.u32 %v1452, 7
        %v1454 = vsub.s32 %v1069, %v1453
        %v1455 = vrot.slane %v1398, %v1454
        %v1456 = vsel %vm1074, %v1455, %v1451
        %v1457 = vlaneseq
        %v1458 = vshrl.u32 %v1457, 7
        %v1459 = vsub.s32 %v1064, %v1458
        %v1460 = vrot.slane %v1400, %v1459
        %v1461 = vlaneseq
        %v1462 = vshrl.u32 %v1461, 7
        %v1463 = vsub.s32 %v1069, %v1462
        %v1464 = vrot.slane %v1402, %v1463
        %v1465 = vsel %vm1074, %v1464, %v1460
        %v1466 = vlaneseq
        %v1467 = vshrl.u32 %v1466, 7
        %v1468 = vsub.s32 %v1064, %v1467
        %v1469 = vrot.slane %v1404, %v1468
        %v1470 = vlaneseq
        %v1471 = vshrl.u32 %v1470, 7
        %v1472 = vsub.s32 %v1069, %v1471
        %v1473 = vrot.slane %v1406, %v1472
        %v1474 = vsel %vm1074, %v1473, %v1469
        %v1475 = vlaneseq
        %v1476 = vshrl.u32 %v1475, 7
        %v1477 = vsub.s32 %v1064, %v1476
        %v1478 = vrot.slane %v1408, %v1477
        %v1479 = vlaneseq
        %v1480 = vshrl.u32 %v1479, 7
        %v1481 = vsub.s32 %v1069, %v1480
        %v1482 = vrot.slane %v1410, %v1481
        %v1483 = vsel %vm1074, %v1482, %v1478
        %v1484 = vlaneseq
        %v1485 = vshrl.u32 %v1484, 7
        %v1486 = vsub.s32 %v1064, %v1485
        %v1487 = vrot.slane %v1412, %v1486
        %v1488 = vlaneseq
        %v1489 = vshrl.u32 %v1488, 7
        %v1490 = vsub.s32 %v1069, %v1489
        %v1491 = vrot.slane %v1414, %v1490
        %v1492 = vsel %vm1074, %v1491, %v1487
        %v1493 = vlaneseq
        %v1494 = vshrl.u32 %v1493, 7
        %v1495 = vsub.s32 %v1064, %v1494
        %v1496 = vrot.slane %v1416, %v1495
        %v1497 = vlaneseq
        %v1498 = vshrl.u32 %v1497, 7
        %v1499 = vsub.s32 %v1069, %v1498
        %v1500 = vrot.slane %v1418, %v1499
        %v1501 = vsel %vm1074, %v1500, %v1496
        %v1502 = vlaneseq
        %v1503 = vshrl.u32 %v1502, 7
        %v1504 = vsub.s32 %v1064, %v1503
        %v1505 = vrot.slane %v1420, %v1504
        %v1506 = vlaneseq
        %v1507 = vshrl.u32 %v1506, 7
        %v1508 = vsub.s32 %v1069, %v1507
        %v1509 = vrot.slane %v1422, %v1508
        %v1510 = vsel %vm1074, %v1509, %v1505
        %v1511 = vsel %vm1139, %v1456, %v1447
        %v1512 = vsel %vm1141, %v1465, %v1511
        %v1513 = vsel %vm1143, %v1474, %v1512
        %v1514 = vsel %vm1145, %v1483, %v1513
        %v1515 = vsel %vm1147, %v1492, %v1514
        %v1516 = vsel %vm1149, %v1501, %v1515
        %v1517 = vsel %vm1151, %v1510, %v1516
        %v1519 = vsel %vm1220, %v1517, -1e+30
        %v1520 = vsel %vm1155, %v1519, -inf
        %1521 = vmax.xlane.f32.xlu0 %v1520
        %v1522 = vpop.xlane.xlu0 %1521
        %v1523 = vsub.f32 %v1519, %v1522
        %v1524 = vmul.f32 %v1523, 1.442695
        %v1525 = vpow.pop %v1524
        %v1526 = vsel %vm1220, %v1525, 0.0
        %v1527 = vsel %vm1155, %v1526, 0.0
        %1528 = vadd.xlane.f32.xlu0 %v1527
        %v1529 = vpop.xlane.xlu0 %1528
        %v1530 = vpack.c.bf16 %v1526, %v1526
        %v1532 = vsel %vm1155, %v1530, 0
        %1534 = vmatprep.subr.bf16.mxu0 0
        %1535 = vmatpush1.bf16.msra.mxu0 %v833
        %1536 = vmatprep.subr.bf16.mxu0 0
        %1537 = vmatpush1.bf16.msra.mxu0 0
        %1538 = vmatprep.subr.bf16.mxu0 0
        %1539 = vmatpush1.bf16.msra.mxu0 0
        %1540 = vmatprep.subr.bf16.mxu0 0
        %1541 = vmatpush1.bf16.msra.mxu0 0
        %1542 = vmatprep.subr.bf16.mxu0 0
        %1543 = vmatpush1.bf16.msra.mxu0 0
        %1544 = vmatprep.subr.bf16.mxu0 0
        %1545 = vmatpush1.bf16.msra.mxu0 0
        %1546 = vmatprep.subr.bf16.mxu0 0
        %1547 = vmatpush1.bf16.msra.mxu0 0
        %1548 = vmatprep.subr.bf16.mxu0 0
        %1549 = vmatpush1.bf16.msra.mxu0 0
        %1550 = vmatprep.subr.bf16.mxu0 0
        %1551 = vmatpush1.bf16.msra.mxu0 0
        %1552 = vmatprep.subr.bf16.mxu0 0
        %1553 = vmatpush1.bf16.msra.mxu0 0
        %1554 = vmatprep.subr.bf16.mxu0 0
        %1555 = vmatpush1.bf16.msra.mxu0 0
        %1556 = vmatprep.subr.bf16.mxu0 0
        %1557 = vmatpush1.bf16.msra.mxu0 0
        %1558 = vmatprep.subr.bf16.mxu0 0
        %1559 = vmatpush1.bf16.msra.mxu0 0
        %1560 = vmatprep.subr.bf16.mxu0 0
        %1561 = vmatpush1.bf16.msra.mxu0 0
        %1562 = vmatprep.subr.bf16.mxu0 0
        %1563 = vmatpush1.bf16.msra.mxu0 0
        %1564 = vmatprep.subr.bf16.mxu0 0
        %1565 = vmatpush1.bf16.msra.mxu0 0
        %1566 = vmatprep.mubr.bf16.mxu0 0
        %1567 = vmatmul.mubr.bf16.gmra.mrb[0].mxu0 %v1532
        %v1568 = vpop.f32.mrb[0].mxu0
        %v1569 = vadd.f32 0.0, %v1568
        %v1570 = vpop.f32.mrb[0].mxu0
        %v1571 = vpop.f32.mrb[0].mxu0
        %v1572 = vpop.f32.mrb[0].mxu0
        %1573 = vdwg.mxu0
        %v1574 = vmax.f32 %v1529, 1e-30
        %v1575 = vrcp.pop %v1574
        %v1576 = vmul.f32 %v1569, %v1575
        %v1577 = vadd.f32 %v1576, %v1217
        // Predicated region
        $region85: #{kg_hetero_gnn_forward.1} parent=51 // pred_check
          %p1578 = pneg %p537
        $region86: #{kg_hetero_gnn_forward.1} parent=51 // pred_check_branch
          %1580 = sbr.rel (%p1578) target = $region88
        $region87: #{kg_hetero_gnn_forward.1} parent=51 // pred_region
          %1581 = vst [vmem:[#allocation3] sm:$0xff] %v1219
          %1582 = vst [vmem:[#allocation3 + $0x8] sm:$0xff] %v1577
        $region88: #{kg_hetero_gnn_forward.1} parent=51 // pred_fallthru
          _
        %p1583 = scmp.ne.s32.totalorder %s536, 1
        // Predicated region
        $region89: #{kg_hetero_gnn_forward.1} parent=51 // pred_check
          %p1584 = pneg %p1583
        $region90: #{kg_hetero_gnn_forward.1} parent=51 // pred_check_branch
          %1586 = sbr.rel (%p1584) target = $region92
        $region91: #{kg_hetero_gnn_forward.1} parent=51 // pred_region
          %v1587 = vld [vmem:[#allocation3] sm:$0xff]
          %v1588 = vld [vmem:[#allocation3 + $0x8] sm:$0xff]
          %v1589 = vadd.f32 %v1587, %v1219
          %v1590 = vadd.f32 %v1588, %v1577
          %1591 = vst [vmem:[#allocation3] sm:$0xff] %v1589
          %1592 = vst [vmem:[#allocation3 + $0x8] sm:$0xff] %v1590
        $region92: #{kg_hetero_gnn_forward.1} parent=51 // pred_fallthru
          _
        // Predicated region
        $region93: #{kg_hetero_gnn_forward.1} parent=51 // pred_check
          %p1593 = pneg %p539
        $region94: #{kg_hetero_gnn_forward.1} parent=51 // pred_check_branch
          %1595 = sbr.rel (%p1593) target = $region96
        $region95: #{kg_hetero_gnn_forward.1} parent=51 // pred_region
          %v1596 = vld [vmem:[#allocation3] sm:$0xff]
          %v1597 = vld [vmem:[#allocation3 + $0x8] sm:$0xff]
          %v1598 = vmax.f32 %v1596, 0.0
          %v1599 = vmax.f32 %v1597, 0.0
          %v1600 = vpack.c.bf16 %v1599, %v1598
          %s1601 = sadd.s32 %s566, %s535
          %s1602 = smul.addr %s1601, 8
          %s1603 = scalar_lea.vmem [#allocation2], %s1602
          %1604 = vst [vmem:[%s1603] sm:$0xff] %v1600
        $region96: #{kg_hetero_gnn_forward.1} parent=51 // pred_fallthru
          _
        %p1605 = scmp.eq.s32.totalorder %s56, 1
        %p1606 = scmp.eq.s32.totalorder %s535, 0
        %p1607 = pnand %p1605, %p1606
        %p1608 = pneg %p1607
        %p1609 = pnand %p539, %p1608
        %p1610 = pneg %p1609
        // Predicated region
        $region97: #{kg_hetero_gnn_forward.1} parent=51 // pred_check
          _
        $region98: #{kg_hetero_gnn_forward.1} parent=51 // pred_check_branch
          %1612 = sbr.rel (%p1609) target = $region100
        $region99: #{kg_hetero_gnn_forward.1} parent=51 // pred_region
          %v1613 = vld [vmem:[#allocation3] sm:$0xff]
          %v1614 = vld [vmem:[#allocation3 + $0x8] sm:$0xff]
          %v1615 = vmax.f32 %v1613, 0.0
          %v1616 = vmax.f32 %v1614, 0.0
          %v1617 = vpack.c.bf16 %v1616, %v1615
          %v1618 = vld [vmem:[#allocation20] sm:$0xf]
          %v1619 = vld [vmem:[#allocation20 + $0x4] sm:$0xf]
          %v1620 = vld [vmem:[#allocation20 + $0x8] sm:$0xf]
          %v1621 = vld [vmem:[#allocation20 + $0xc] sm:$0xf]
          %v1622 = vld [vmem:[#allocation20 + $0x10] sm:$0xf]
          %v1623 = vld [vmem:[#allocation20 + $0x14] sm:$0xf]
          %v1624 = vld [vmem:[#allocation20 + $0x18] sm:$0xf]
          %v1625 = vld [vmem:[#allocation20 + $0x1c] sm:$0xf]
          %v1626 = vld [vmem:[#allocation20 + $0x20] sm:$0xf]
          %v1627 = vld [vmem:[#allocation20 + $0x24] sm:$0xf]
          %v1628 = vld [vmem:[#allocation20 + $0x28] sm:$0xf]
          %v1629 = vld [vmem:[#allocation20 + $0x2c] sm:$0xf]
          %v1630 = vld [vmem:[#allocation20 + $0x30] sm:$0xf]
          %v1631 = vld [vmem:[#allocation20 + $0x34] sm:$0xf]
          %v1632 = vld [vmem:[#allocation20 + $0x38] sm:$0xf]
          %v1633 = vld [vmem:[#allocation20 + $0x3c] sm:$0xf]
          %v1634 = vld [vmem:[%s11] sm:$0x1]
          %v1636 = vlaneseq
          %v1637 = vshrl.u32 %v1636, 7
          %v1638 = vsub.s32 0, %v1637
          %v1639 = vrot.slane %v1634, %v1638
          %v1657 = vunpack.c.l.b16 %v1618
          %v1658 = vunpack.c.l.b16 %v1619
          %v1659 = vunpack.c.l.b16 %v1620
          %v1660 = vunpack.c.l.b16 %v1621
          %v1661 = vunpack.c.l.b16 %v1622
          %v1662 = vunpack.c.l.b16 %v1623
          %v1663 = vunpack.c.l.b16 %v1624
          %v1664 = vunpack.c.l.b16 %v1625
          %v1665 = vunpack.c.l.b16 %v1626
          %v1666 = vunpack.c.l.b16 %v1627
          %v1667 = vunpack.c.l.b16 %v1628
          %v1668 = vunpack.c.l.b16 %v1629
          %v1669 = vunpack.c.l.b16 %v1630
          %v1670 = vunpack.c.l.b16 %v1631
          %v1671 = vunpack.c.l.b16 %v1632
          %v1672 = vunpack.c.l.b16 %v1633
          %v1673 = vpack.c.b16 %v1658, %v1657
          %v1674 = vpack.c.b16 %v1660, %v1659
          %v1675 = vpack.c.b16 %v1662, %v1661
          %v1676 = vpack.c.b16 %v1664, %v1663
          %v1677 = vpack.c.b16 %v1666, %v1665
          %v1678 = vpack.c.b16 %v1668, %v1667
          %v1679 = vpack.c.b16 %v1670, %v1669
          %v1680 = vpack.c.b16 %v1672, %v1671
          %1689 = vmatprep.subr.bf16.mxu0 0
          %1690 = vmatpush1.bf16.msra.mxu0 %v1673
          %1691 = vmatprep.subr.bf16.mxu0 0
          %1692 = vmatpush1.bf16.msra.mxu0 %v1674
          %1693 = vmatprep.subr.bf16.mxu0 0
          %1694 = vmatpush1.bf16.msra.mxu0 %v1675
          %1695 = vmatprep.subr.bf16.mxu0 0
          %1696 = vmatpush1.bf16.msra.mxu0 %v1676
          %1697 = vmatprep.subr.bf16.mxu0 0
          %1698 = vmatpush1.bf16.msra.mxu0 %v1677
          %1699 = vmatprep.subr.bf16.mxu0 0
          %1700 = vmatpush1.bf16.msra.mxu0 %v1678
          %1701 = vmatprep.subr.bf16.mxu0 0
          %1702 = vmatpush1.bf16.msra.mxu0 %v1679
          %1703 = vmatprep.subr.bf16.mxu0 0
          %1704 = vmatpush1.bf16.msra.mxu0 %v1680
          %1705 = vmatprep.subr.bf16.mxu0 0
          %1706 = vmatpush1.bf16.msra.mxu0 0
          %1707 = vmatprep.subr.bf16.mxu0 0
          %1708 = vmatpush1.bf16.msra.mxu0 0
          %1709 = vmatprep.subr.bf16.mxu0 0
          %1710 = vmatpush1.bf16.msra.mxu0 0
          %1711 = vmatprep.subr.bf16.mxu0 0
          %1712 = vmatpush1.bf16.msra.mxu0 0
          %1713 = vmatprep.subr.bf16.mxu0 0
          %1714 = vmatpush1.bf16.msra.mxu0 0
          %1715 = vmatprep.subr.bf16.mxu0 0
          %1716 = vmatpush1.bf16.msra.mxu0 0
          %1717 = vmatprep.subr.bf16.mxu0 0
          %1718 = vmatpush1.bf16.msra.mxu0 0
          %1719 = vmatprep.subr.bf16.mxu0 0
          %1720 = vmatpush1.bf16.msra.mxu0 0
          %1721 = vmatprep.mubr.bf16.mxu0 0
          %1722 = vmatmul.mubr.bf16.gmra.mrb[0].mxu0 %v1617
          %v1723 = vpop.f32.mrb[0].mxu0
          %v1724 = vadd.f32 %v1639, %v1723
          %v1725 = vpop.f32.mrb[0].mxu0
          %v1726 = vpop.f32.mrb[0].mxu0
          %v1727 = vadd.f32 %v1639, %v1726
          %v1728 = vpop.f32.mrb[0].mxu0
          %1729 = vdwg.mxu0
          %1730 = vst [vmem:[#allocation21] sm:$0xff] %v1724
          %1731 = vst [vmem:[#allocation21 + $0x8] sm:$0xff] %v1727
        $region100: #{kg_hetero_gnn_forward.1} parent=51 // pred_fallthru
          _
        // Predicated region
        $region101: #{kg_hetero_gnn_forward.1} parent=51 // pred_check
          %p1732 = pneg %p278
        $region102: #{kg_hetero_gnn_forward.1} parent=51 // pred_check_branch
          %1734 = sbr.rel (%p1732) target = $region104
        $region103: #{kg_hetero_gnn_forward.1} parent=51 // pred_region
          %s1736 = ssub.s32 256, 256
          %1737 = vsyncadd [#allocation11], %s1736
          %s1738 = sshll.u32 [#allocation21], 4
          %s1739 = int_to_ptr.vmem [resolvable:$true] %s1738
          %1744 = dma.vmem_to_hbm [thread:$0]  %s1739, 256, %s12, [#allocation11], 128, 128, 8
        $region104: #{kg_hetero_gnn_forward.1} parent=51 // pred_fallthru
          _
        // Predicated region
        $region105: #{kg_hetero_gnn_forward.1} parent=51 // pred_check
          %p1745 = pneg %p278
        $region106: #{kg_hetero_gnn_forward.1} parent=51 // pred_check_branch
          %1747 = sbr.rel (%p1745) target = $region108
        $region107: #{kg_hetero_gnn_forward.1} parent=51 // pred_region
          %1748 = dma.done [#allocation11], 256
        $region108: #{kg_hetero_gnn_forward.1} parent=51 // pred_fallthru
          _
      $region52: #{kg_hetero_gnn_forward.1} parent=5 // pred_fallthru
        _
      %p1749 = scmp.le.s32.totalorder 2, %s47
      // Predicated region
      $region109: #{kg_hetero_gnn_forward.1} parent=5 // pred_check
        %p1750 = pneg %p1749
      $region110: #{kg_hetero_gnn_forward.1} parent=5 // pred_check_branch
        %1752 = sbr.rel (%p1750) target = $region112
      $region111: #{kg_hetero_gnn_forward.1} parent=5 // pred_region
        %s1753 = ssub.s32 %s47, 2
      $region112: #{kg_hetero_gnn_forward.1} parent=5 // pred_fallthru
        _
    $region6: #{kg_hetero_gnn_forward.1} parent=1 // loop_footer
      %s51 = sadd.s32 1, %s47
    $region7: #{kg_hetero_gnn_forward.1} parent=1 // loop_footer_branch
      %46 = sbr.rel target = $region3
    $region8: #{kg_hetero_gnn_forward.1} parent=1 // loop_exit
      _
    %1754 = vsyncpa [#allocation10], 1
    %s1755 = scalar_lea.sflag [#allocation10], 1
    %1756 = vsyncpa %s1755, 1
    %1757 = vsyncpa [#allocation13], 1
    %s1758 = scalar_lea.sflag [#allocation13], 1
    %1759 = vsyncpa %s1758, 1
    %1760 = vsyncpa [#allocation16], 1
    %s1761 = scalar_lea.sflag [#allocation16], 1
    %1762 = vsyncpa %s1761, 1
    %1763 = vsyncpa [#allocation19], 1
    %s1764 = scalar_lea.sflag [#allocation19], 1
    %1765 = vsyncpa %s1764, 1
    %1766 = vsyncpa [#allocation11], 1
    %s1767 = scalar_lea.sflag [#allocation11], 1
    %1768 = vsyncpa %s1767, 1

</llo_original>
